<compile_context>
chip_gen: v5e
topology: v5e:2x2
jax: 0.10.0
libtpu: 0.0.40
codegen_flags: <defaults>
</compile_context>

<pallas_src>
import jax
import jax.numpy as jnp
from jax.experimental import pallas as pl
from jax.experimental.pallas import tpu as pltpu

IN_CHANNELS = 28
HIDDEN = 32
FF_HIDDEN = 64
LANE = 128


def _gcn_kernel(a_ref, x_ref, dinv_ref, seg_ref,
                w1_ref, w2_ref, w3_ref, b1_ref, b2_ref, b3_ref,
                pooled_ref):
    f32, bf16 = jnp.float32, jnp.bfloat16
    a = a_ref[...]        # [TB, M, M]  bf16 raw 0/1 adjacency (+ self loops)
    dinv = dinv_ref[...]  # [TB, M, 1]  f32  D^{-1/2} per node (0 on padding)
    h = x_ref[...]        # [TB, M, F]  bf16 packed node features

    def conv(h_bf16, w_ref, b_ref):
        t, m, k = h_bf16.shape
        # X @ W (weights shared across tiles) -- contiguous leading-dim merge,
        # layout no-op, keeps the matmul a plain 2-D MXU pass.
        hw = jnp.dot(h_bf16.reshape(t * m, k), w_ref[...],
                     preferred_element_type=f32)
        hw = hw.reshape(t, m, w_ref.shape[1])
        # D^{-1/2} A D^{-1/2} (XW)  ==  dinv * (A_raw @ (dinv * XW))
        hw = (hw * dinv).astype(bf16)
        agg = jnp.einsum('tmn,tnh->tmh', a, hw, preferred_element_type=f32)
        return agg * dinv + b_ref[...]

    h = jnp.maximum(conv(h, w1_ref, b1_ref), 0.0).astype(bf16)   # GCNConv 1 + ReLU
    h = jnp.maximum(conv(h, w2_ref, b2_ref), 0.0).astype(bf16)   # GCNConv 2 + ReLU
    h = conv(h, w3_ref, b3_ref)                                  # GCNConv 3 (no act)

    # masked global_add_pool for every graph packed in each tile (MXU matmul).
    # Padding rows/slots have zero seg entries so relu(bias) pad values never leak.
    seg = seg_ref[...]    # [TB, G_per_tile, M] f32 one-hot segment matrix
    pooled_ref[...] = jnp.einsum('tgm,tmh->tgh', seg, h,
                                 preferred_element_type=f32)


def gcn_forward(x, edge_index, batch, params, num_graphs, max_nodes):
    """GCN_Model forward (inference). `num_graphs` and `max_nodes` are static.

    Assumes the standard PyG batching invariant: nodes of each graph are
    contiguous and `batch` is sorted, and every graph has <= max_nodes nodes.
    """
    n, f = x.shape
    batch = batch.astype(jnp.int32)

    # ---- static packing geometry -------------------------------------------
    slot = int(max_nodes)
    if slot <= LANE:
        m = LANE
        gpt = LANE // slot                      # graphs packed per 128-node tile
    else:
        m = ((slot + LANE - 1) // LANE) * LANE  # one big graph per tile
        gpt = 1
    num_tiles = -(-num_graphs // gpt)
    # tiles per grid step: amortize per-step overhead, cap streamed-A VMEM
    # (~<=1 MiB/step => <=2 MiB double-buffered), keep >=2 steps for v7x megacore.
    tb = max(1, min(8, (1 << 20) // (m * m * 2)))
    if num_tiles > 1:
        tb = min(tb, max(1, num_tiles // 2))
    tb = min(tb, num_tiles)
    tiles_pad = -(-num_tiles // tb) * tb
    grid = (tiles_pad // tb,)

    # ---- per-node placement inside its tile (all traced, jit friendly) ------
    counts = jnp.zeros((num_graphs,), jnp.int32).at[batch].add(1)
    offsets = jnp.concatenate([jnp.zeros((1,), jnp.int32),
                               jnp.cumsum(counts)[:-1]])
    pos = jnp.arange(n, dtype=jnp.int32) - offsets[batch]   # index within graph
    g_ids = jnp.arange(num_graphs, dtype=jnp.int32)
    node_tile = (g_ids // gpt)[batch]
    node_slot = (g_ids % gpt)[batch]
    node_idx = node_slot * slot + pos

    # ---- packed node features (bf16, feature dim padded with zeros) ---------
    fp = max(8, ((f + 7) // 8) * 8)
    xp = jnp.pad(x.astype(jnp.float32), ((0, 0), (0, fp - f))).astype(jnp.bfloat16)
    x_tiles = jnp.zeros((tiles_pad, m, fp), jnp.bfloat16)
    x_tiles = x_tiles.at[node_tile, node_idx].set(xp)

    # ---- raw block-diagonal adjacency, built directly in bf16 ---------------
    src = edge_index[0].astype(jnp.int32)
    dst = edge_index[1].astype(jnp.int32)
    non_loop = src != dst
    ew = jnp.where(non_loop, 1.0, 0.0).astype(jnp.bfloat16)
    adj = jnp.zeros((tiles_pad, m, m), jnp.bfloat16)
    # message src -> dst : row = dst, col = src ; duplicate edges accumulate
    adj = adj.at[node_tile[dst], node_idx[dst], node_idx[src]].add(ew)
    # exactly one self loop per real node (add_remaining_self_loops semantics)
    adj = adj.at[node_tile, node_idx, node_idx].set(1.0)

    # ---- D^{-1/2} per node (folded into the kernel, never a [T,M,M] array) --
    deg = jnp.zeros((tiles_pad, m), jnp.float32)
    deg = deg.at[node_tile[dst], node_idx[dst]].add(jnp.where(non_loop, 1.0, 0.0))
    deg = deg.at[node_tile, node_idx].add(1.0)                 # self loops
    dinv = jnp.where(deg > 0, jax.lax.rsqrt(deg), 0.0)[:, :, None]   # [T, M, 1]

    # ---- one-hot segment matrix for in-kernel global_add_pool ---------------
    seg = jnp.zeros((tiles_pad, gpt, m), jnp.float32)
    seg = seg.at[node_tile, node_slot, node_idx].set(1.0)

    # ---- conv weights to bf16 (feature-padded W1), biases stay f32 ----------
    w1 = jnp.zeros((fp, HIDDEN), jnp.float32).at[:f].set(params["w1"])
    w1 = w1.astype(jnp.bfloat16)
    w2 = params["w2"].astype(jnp.bfloat16)
    w3 = params["w3"].astype(jnp.bfloat16)
    b1 = params["b1"].reshape(1, 1, HIDDEN)
    b2 = params["b2"].reshape(1, 1, HIDDEN)
    b3 = params["b3"].reshape(1, 1, HIDDEN)

    def tile_spec(shape):
        nd = len(shape)
        return pl.BlockSpec((tb,) + tuple(shape[1:]),
                            lambda i: (i,) + (0,) * (nd - 1))

    def full_spec(shape):
        nd = len(shape)
        return pl.BlockSpec(tuple(shape), lambda i: (0,) * nd)

    pooled = pl.pallas_call(
        _gcn_kernel,
        out_shape=jax.ShapeDtypeStruct((tiles_pad, gpt, HIDDEN), jnp.float32),
        grid=grid,
        in_specs=[tile_spec(adj.shape), tile_spec(x_tiles.shape),
                  tile_spec(dinv.shape), tile_spec(seg.shape),
                  full_spec(w1.shape), full_spec(w2.shape), full_spec(w3.shape),
                  full_spec(b1.shape), full_spec(b2.shape), full_spec(b3.shape)],
        out_specs=tile_spec((tiles_pad, gpt, HIDDEN)),
        compiler_params=pltpu.CompilerParams(
            dimension_semantics=("parallel",)),   # independent tiles -> megacore on v7x
    )(adj, x_tiles, dinv, seg, w1, w2, w3, b1, b2, b3)

    # ---- MLP head: one batched XLA matmul over all graphs (tiny, lane-poor
    # in-kernel, so it is deliberately kept outside the Pallas kernel) --------
    g = pooled.reshape(tiles_pad * gpt, HIDDEN)[:num_graphs]   # graph g -> row g
    y = jnp.maximum(g @ params["lw1"] + params["lb1"], 0.0)
    # ff_dropout(p=0.25) is identity at inference
    return y @ params["lw2"] + params["lb2"]


def _init_linear(key, fan_in, fan_out):
    # deterministic, PyTorch-Linear-style uniform(-1/sqrt(fan_in), 1/sqrt(fan_in))
    k_w, k_b = jax.random.split(key)
    bound = 1.0 / (fan_in ** 0.5)
    w = jax.random.uniform(k_w, (fan_in, fan_out), jnp.float32, -bound, bound)
    b = jax.random.uniform(k_b, (1, fan_out), jnp.float32, -bound, bound)
    return w, b


def _reference_forward(x, edge_index, batch, params, num_graphs):
    """Pure-JAX f32 reference (dense A over all nodes) for a correctness check."""
    n = x.shape[0]
    src, dst = edge_index[0], edge_index[1]
    a = jnp.zeros((n, n), jnp.float32)
    a = a.at[dst, src].add(jnp.where(src != dst, 1.0, 0.0))
    a = a.at[jnp.arange(n), jnp.arange(n)].set(1.0)
    deg = a.sum(axis=1)
    dinv = jnp.where(deg > 0, 1.0 / jnp.sqrt(deg), 0.0)
    a_hat = dinv[:, None] * a * dinv[None, :]
    h = jnp.maximum(a_hat @ (x @ params["w1"]) + params["b1"], 0.0)
    h = jnp.maximum(a_hat @ (h @ params["w2"]) + params["b2"], 0.0)
    h = a_hat @ (h @ params["w3"]) + params["b3"]
    g = jnp.zeros((num_graphs, HIDDEN), jnp.float32).at[batch].add(h)
    y = jnp.maximum(g @ params["lw1"] + params["lb1"], 0.0)
    return y @ params["lw2"] + params["lb2"]


if __name__ == "__main__":
    key = jax.random.PRNGKey(0)
    num_graphs = 10
    nodes_per_graph = 12
    max_nodes = 16            # static dataset-level cap -> 8 graphs per 128-node tile
    n = num_graphs * nodes_per_graph

    k_x, k_p = jax.random.split(key)
    x = jax.random.normal(k_x, (n, IN_CHANNELS), jnp.float32)

    # deterministic bidirectional chain edges within each graph
    srcs, dsts = [], []
    for g in range(num_graphs):
        off = g * nodes_per_graph
        for i in range(nodes_per_graph - 1):
            srcs += [off + i, off + i + 1]
            dsts += [off + i + 1, off + i]
    edge_index = jnp.array([srcs, dsts], dtype=jnp.int32)
    batch = jnp.repeat(jnp.arange(num_graphs, dtype=jnp.int32), nodes_per_graph)

    keys = jax.random.split(k_p, 5)
    w1, b1 = _init_linear(keys[0], IN_CHANNELS, HIDDEN)
    w2, b2 = _init_linear(keys[1], HIDDEN, HIDDEN)
    w3, b3 = _init_linear(keys[2], HIDDEN, HIDDEN)
    lw1, lb1 = _init_linear(keys[3], HIDDEN, FF_HIDDEN)
    lw2, lb2 = _init_linear(keys[4], FF_HIDDEN, 1)
    params = dict(w1=w1, b1=b1, w2=w2, b2=b2, w3=w3, b3=b3,
                  lw1=lw1, lb1=lb1, lw2=lw2, lb2=lb2)

    fwd = jax.jit(gcn_forward, static_argnames=("num_graphs", "max_nodes"))
    out = fwd(x, edge_index, batch, params,
              num_graphs=num_graphs, max_nodes=max_nodes)
    jax.block_until_ready(out)
    assert out.shape == (num_graphs, 1)

    ref = _reference_forward(x, edge_index, batch, params, num_graphs)
    assert bool(jnp.allclose(out, ref, rtol=1e-1, atol=1e-1)), (
        f"mismatch: max abs err {float(jnp.max(jnp.abs(out - ref)))}")
    print("KERNEL_OK")
</pallas_src>

<mosaic_0001>
module attributes {stable_mosaic.version = 11 : i64} {
  func.func @_gcn_kernel(%arg0: i32, %arg1: memref<1x128x128xbf16, #tpu.memory_space<vmem>>, %arg2: memref<1x128x32xbf16, #tpu.memory_space<vmem>>, %arg3: memref<1x128x1xf32, #tpu.memory_space<vmem>>, %arg4: memref<1x8x128xf32, #tpu.memory_space<vmem>>, %arg5: memref<32x32xbf16, #tpu.memory_space<vmem>>, %arg6: memref<32x32xbf16, #tpu.memory_space<vmem>>, %arg7: memref<32x32xbf16, #tpu.memory_space<vmem>>, %arg8: memref<1x1x32xf32, #tpu.memory_space<vmem>>, %arg9: memref<1x1x32xf32, #tpu.memory_space<vmem>>, %arg10: memref<1x1x32xf32, #tpu.memory_space<vmem>>, %arg11: memref<1x8x32xf32, #tpu.memory_space<vmem>>) attributes {dimension_semantics = [#tpu.dimension_semantics<parallel>], iteration_bounds = array<i64: 2>, scalar_prefetch = 0 : i64, scratch_operands = 0 : i64, tpu.core_type = #tpu.core_type<tc>, window_params = [{transform_indices = @transform_0, window_bounds = array<i64: 1, 128, 128>}, {transform_indices = @transform_1, window_bounds = array<i64: 1, 128, 32>}, {transform_indices = @transform_2, window_bounds = array<i64: 1, 128, 1>}, {transform_indices = @transform_3, window_bounds = array<i64: 1, 8, 128>}, {pipeline_mode = #tpu.pipeline_mode<synchronous>, transform_indices = @transform_4, window_bounds = array<i64: 32, 32>}, {pipeline_mode = #tpu.pipeline_mode<synchronous>, transform_indices = @transform_5, window_bounds = array<i64: 32, 32>}, {pipeline_mode = #tpu.pipeline_mode<synchronous>, transform_indices = @transform_6, window_bounds = array<i64: 32, 32>}, {pipeline_mode = #tpu.pipeline_mode<synchronous>, transform_indices = @transform_7, window_bounds = array<i64: 1, 1, 32>}, {pipeline_mode = #tpu.pipeline_mode<synchronous>, transform_indices = @transform_8, window_bounds = array<i64: 1, 1, 32>}, {pipeline_mode = #tpu.pipeline_mode<synchronous>, transform_indices = @transform_9, window_bounds = array<i64: 1, 1, 32>}, {transform_indices = @transform_10, window_bounds = array<i64: 1, 8, 32>}]} {
    %c0 = arith.constant 0 : index
    %c0_0 = arith.constant 0 : index
    %c0_1 = arith.constant 0 : index
    %0 = vector.load %arg1[%c0, %c0_0, %c0_1] : memref<1x128x128xbf16, #tpu.memory_space<vmem>>, vector<1x128x128xbf16>
    %c0_2 = arith.constant 0 : index
    %c0_3 = arith.constant 0 : index
    %c0_4 = arith.constant 0 : index
    %1 = vector.load %arg3[%c0_2, %c0_3, %c0_4] : memref<1x128x1xf32, #tpu.memory_space<vmem>>, vector<1x128x1xf32>
    %c0_5 = arith.constant 0 : index
    %c0_6 = arith.constant 0 : index
    %c0_7 = arith.constant 0 : index
    %2 = vector.load %arg2[%c0_5, %c0_6, %c0_7] : memref<1x128x32xbf16, #tpu.memory_space<vmem>>, vector<1x128x32xbf16>
    %3 = vector.shape_cast %2 : vector<1x128x32xbf16> to vector<128x32xbf16>
    %c0_8 = arith.constant 0 : index
    %c0_9 = arith.constant 0 : index
    %4 = vector.load %arg5[%c0_8, %c0_9] : memref<32x32xbf16, #tpu.memory_space<vmem>>, vector<32x32xbf16>
    %cst = arith.constant dense<0.000000e+00> : vector<128x32xf32>
    %5 = tpu.matmul %3, %4, %cst {dimension_numbers = #tpu.dot_dimension_numbers<[1], [0], [0], [1], [0, 0, 1, 1], [], []>} : vector<128x32xbf16>, vector<32x32xbf16>, vector<128x32xf32> -> vector<128x32xf32>
    %6 = vector.shape_cast %5 : vector<128x32xf32> to vector<1x128x32xf32>
    %7 = vector.broadcast %1 : vector<1x128x1xf32> to vector<1x128x32xf32>
    %8 = arith.mulf %6, %7 : vector<1x128x32xf32>
    %9 = arith.truncf %8 : vector<1x128x32xf32> to vector<1x128x32xbf16>
    "tpu.trace_start"() <{level = 10 : i32, message = "tmn,tnh->tmh"}> : () -> ()
    %cst_10 = arith.constant dense<0.000000e+00> : vector<1x128x32xf32>
    %10 = tpu.matmul %0, %9, %cst_10 {dimension_numbers = #tpu.dot_dimension_numbers<[2], [1], [1], [2], [0, 0, 0, 1, 1, 2], [0], [0]>} : vector<1x128x128xbf16>, vector<1x128x32xbf16>, vector<1x128x32xf32> -> vector<1x128x32xf32>
    "tpu.trace_stop"() : () -> ()
    %11 = vector.broadcast %1 : vector<1x128x1xf32> to vector<1x128x32xf32>
    %12 = arith.mulf %10, %11 : vector<1x128x32xf32>
    %c0_11 = arith.constant 0 : index
    %c0_12 = arith.constant 0 : index
    %c0_13 = arith.constant 0 : index
    %13 = vector.load %arg8[%c0_11, %c0_12, %c0_13] : memref<1x1x32xf32, #tpu.memory_space<vmem>>, vector<1x1x32xf32>
    %14 = vector.broadcast %13 : vector<1x1x32xf32> to vector<1x128x32xf32>
    %15 = arith.addf %12, %14 : vector<1x128x32xf32>
    %cst_14 = arith.constant 0.000000e+00 : f32
    %16 = vector.broadcast %cst_14 : f32 to vector<1x128x32xf32>
    %17 = arith.maximumf %15, %16 : vector<1x128x32xf32>
    %18 = arith.truncf %17 : vector<1x128x32xf32> to vector<1x128x32xbf16>
    %19 = vector.shape_cast %18 : vector<1x128x32xbf16> to vector<128x32xbf16>
    %c0_15 = arith.constant 0 : index
    %c0_16 = arith.constant 0 : index
    %20 = vector.load %arg6[%c0_15, %c0_16] : memref<32x32xbf16, #tpu.memory_space<vmem>>, vector<32x32xbf16>
    %cst_17 = arith.constant dense<0.000000e+00> : vector<128x32xf32>
    %21 = tpu.matmul %19, %20, %cst_17 {dimension_numbers = #tpu.dot_dimension_numbers<[1], [0], [0], [1], [0, 0, 1, 1], [], []>} : vector<128x32xbf16>, vector<32x32xbf16>, vector<128x32xf32> -> vector<128x32xf32>
    %22 = vector.shape_cast %21 : vector<128x32xf32> to vector<1x128x32xf32>
    %23 = vector.broadcast %1 : vector<1x128x1xf32> to vector<1x128x32xf32>
    %24 = arith.mulf %22, %23 : vector<1x128x32xf32>
    %25 = arith.truncf %24 : vector<1x128x32xf32> to vector<1x128x32xbf16>
    "tpu.trace_start"() <{level = 10 : i32, message = "tmn,tnh->tmh"}> : () -> ()
    %cst_18 = arith.constant dense<0.000000e+00> : vector<1x128x32xf32>
    %26 = tpu.matmul %0, %25, %cst_18 {dimension_numbers = #tpu.dot_dimension_numbers<[2], [1], [1], [2], [0, 0, 0, 1, 1, 2], [0], [0]>} : vector<1x128x128xbf16>, vector<1x128x32xbf16>, vector<1x128x32xf32> -> vector<1x128x32xf32>
    "tpu.trace_stop"() : () -> ()
    %27 = vector.broadcast %1 : vector<1x128x1xf32> to vector<1x128x32xf32>
    %28 = arith.mulf %26, %27 : vector<1x128x32xf32>
    %c0_19 = arith.constant 0 : index
    %c0_20 = arith.constant 0 : index
    %c0_21 = arith.constant 0 : index
    %29 = vector.load %arg9[%c0_19, %c0_20, %c0_21] : memref<1x1x32xf32, #tpu.memory_space<vmem>>, vector<1x1x32xf32>
    %30 = vector.broadcast %29 : vector<1x1x32xf32> to vector<1x128x32xf32>
    %31 = arith.addf %28, %30 : vector<1x128x32xf32>
    %cst_22 = arith.constant 0.000000e+00 : f32
    %32 = vector.broadcast %cst_22 : f32 to vector<1x128x32xf32>
    %33 = arith.maximumf %31, %32 : vector<1x128x32xf32>
    %34 = arith.truncf %33 : vector<1x128x32xf32> to vector<1x128x32xbf16>
    %35 = vector.shape_cast %34 : vector<1x128x32xbf16> to vector<128x32xbf16>
    %c0_23 = arith.constant 0 : index
    %c0_24 = arith.constant 0 : index
    %36 = vector.load %arg7[%c0_23, %c0_24] : memref<32x32xbf16, #tpu.memory_space<vmem>>, vector<32x32xbf16>
    %cst_25 = arith.constant dense<0.000000e+00> : vector<128x32xf32>
    %37 = tpu.matmul %35, %36, %cst_25 {dimension_numbers = #tpu.dot_dimension_numbers<[1], [0], [0], [1], [0, 0, 1, 1], [], []>} : vector<128x32xbf16>, vector<32x32xbf16>, vector<128x32xf32> -> vector<128x32xf32>
    %38 = vector.shape_cast %37 : vector<128x32xf32> to vector<1x128x32xf32>
    %39 = vector.broadcast %1 : vector<1x128x1xf32> to vector<1x128x32xf32>
    %40 = arith.mulf %38, %39 : vector<1x128x32xf32>
    %41 = arith.truncf %40 : vector<1x128x32xf32> to vector<1x128x32xbf16>
    "tpu.trace_start"() <{level = 10 : i32, message = "tmn,tnh->tmh"}> : () -> ()
    %cst_26 = arith.constant dense<0.000000e+00> : vector<1x128x32xf32>
    %42 = tpu.matmul %0, %41, %cst_26 {dimension_numbers = #tpu.dot_dimension_numbers<[2], [1], [1], [2], [0, 0, 0, 1, 1, 2], [0], [0]>} : vector<1x128x128xbf16>, vector<1x128x32xbf16>, vector<1x128x32xf32> -> vector<1x128x32xf32>
    "tpu.trace_stop"() : () -> ()
    %43 = vector.broadcast %1 : vector<1x128x1xf32> to vector<1x128x32xf32>
    %44 = arith.mulf %42, %43 : vector<1x128x32xf32>
    %c0_27 = arith.constant 0 : index
    %c0_28 = arith.constant 0 : index
    %c0_29 = arith.constant 0 : index
    %45 = vector.load %arg10[%c0_27, %c0_28, %c0_29] : memref<1x1x32xf32, #tpu.memory_space<vmem>>, vector<1x1x32xf32>
    %46 = vector.broadcast %45 : vector<1x1x32xf32> to vector<1x128x32xf32>
    %47 = arith.addf %44, %46 : vector<1x128x32xf32>
    %c0_30 = arith.constant 0 : index
    %c0_31 = arith.constant 0 : index
    %c0_32 = arith.constant 0 : index
    %48 = vector.load %arg4[%c0_30, %c0_31, %c0_32] : memref<1x8x128xf32, #tpu.memory_space<vmem>>, vector<1x8x128xf32>
    "tpu.trace_start"() <{level = 10 : i32, message = "tgm,tmh->tgh"}> : () -> ()
    %cst_33 = arith.constant dense<0.000000e+00> : vector<1x8x32xf32>
    %49 = tpu.matmul %48, %47, %cst_33 {dimension_numbers = #tpu.dot_dimension_numbers<[2], [1], [1], [2], [0, 0, 0, 1, 1, 2], [0], [0]>} : vector<1x8x128xf32>, vector<1x128x32xf32>, vector<1x8x32xf32> -> vector<1x8x32xf32>
    "tpu.trace_stop"() : () -> ()
    %c0_34 = arith.constant 0 : index
    %c0_35 = arith.constant 0 : index
    %c0_36 = arith.constant 0 : index
    %50 = vector.load %arg11[%c0_34, %c0_35, %c0_36] : memref<1x8x32xf32, #tpu.memory_space<vmem>>, vector<1x8x32xf32>
    tpu.vector_store %arg11[%c0_34, %c0_35, %c0_36], %49 {strides = array<i32>} : memref<1x8x32xf32, #tpu.memory_space<vmem>>, vector<1x8x32xf32>,
    return
  }
  func.func @transform_0(%arg0: i32) -> (i32, i32, i32) {
    %c0_i32 = arith.constant 0 : i32
    %c0_i32_0 = arith.constant 0 : i32
    %c0_i32_1 = arith.constant 0 : i32
    return %arg0, %c0_i32, %c0_i32_0 : i32, i32, i32
  }
  func.func @transform_1(%arg0: i32) -> (i32, i32, i32) {
    %c0_i32 = arith.constant 0 : i32
    %c0_i32_0 = arith.constant 0 : i32
    %c0_i32_1 = arith.constant 0 : i32
    return %arg0, %c0_i32, %c0_i32_0 : i32, i32, i32
  }
  func.func @transform_2(%arg0: i32) -> (i32, i32, i32) {
    %c0_i32 = arith.constant 0 : i32
    %c0_i32_0 = arith.constant 0 : i32
    %c0_i32_1 = arith.constant 0 : i32
    return %arg0, %c0_i32, %c0_i32_0 : i32, i32, i32
  }
  func.func @transform_3(%arg0: i32) -> (i32, i32, i32) {
    %c0_i32 = arith.constant 0 : i32
    %c0_i32_0 = arith.constant 0 : i32
    %c0_i32_1 = arith.constant 0 : i32
    return %arg0, %c0_i32, %c0_i32_0 : i32, i32, i32
  }
  func.func @transform_4(%arg0: i32) -> (i32, i32) {
    %c0_i32 = arith.constant 0 : i32
    %c0_i32_0 = arith.constant 0 : i32
    %c0_i32_1 = arith.constant 0 : i32
    return %c0_i32, %c0_i32_0 : i32, i32
  }
  func.func @transform_5(%arg0: i32) -> (i32, i32) {
    %c0_i32 = arith.constant 0 : i32
    %c0_i32_0 = arith.constant 0 : i32
    %c0_i32_1 = arith.constant 0 : i32
    return %c0_i32, %c0_i32_0 : i32, i32
  }
  func.func @transform_6(%arg0: i32) -> (i32, i32) {
    %c0_i32 = arith.constant 0 : i32
    %c0_i32_0 = arith.constant 0 : i32
    %c0_i32_1 = arith.constant 0 : i32
    return %c0_i32, %c0_i32_0 : i32, i32
  }
  func.func @transform_7(%arg0: i32) -> (i32, i32, i32) {
    %c0_i32 = arith.constant 0 : i32
    %c0_i32_0 = arith.constant 0 : i32
    %c0_i32_1 = arith.constant 0 : i32
    %c0_i32_2 = arith.constant 0 : i32
    return %c0_i32, %c0_i32_0, %c0_i32_1 : i32, i32, i32
  }
  func.func @transform_8(%arg0: i32) -> (i32, i32, i32) {
    %c0_i32 = arith.constant 0 : i32
    %c0_i32_0 = arith.constant 0 : i32
    %c0_i32_1 = arith.constant 0 : i32
    %c0_i32_2 = arith.constant 0 : i32
    return %c0_i32, %c0_i32_0, %c0_i32_1 : i32, i32, i32
  }
  func.func @transform_9(%arg0: i32) -> (i32, i32, i32) {
    %c0_i32 = arith.constant 0 : i32
    %c0_i32_0 = arith.constant 0 : i32
    %c0_i32_1 = arith.constant 0 : i32
    %c0_i32_2 = arith.constant 0 : i32
    return %c0_i32, %c0_i32_0, %c0_i32_1 : i32, i32, i32
  }
  func.func @transform_10(%arg0: i32) -> (i32, i32, i32) {
    %c0_i32 = arith.constant 0 : i32
    %c0_i32_0 = arith.constant 0 : i32
    %c0_i32_1 = arith.constant 0 : i32
    return %arg0, %c0_i32, %c0_i32_0 : i32, i32, i32
  }
}

</mosaic_0001>

<llo_original>
// kernel: gcn_forward.1
$region0: #{gcn_forward.1}
  #allocation0 [shape = 'u32[]', space=smem, size = 0x4, offset = 0x4, fixed_abs, tag = 'smem constant byte address 0x4 - core index']
  #allocation1 [shape = 'u32[72,128]{1,0:T(1,128)}', space=vmem, size = 0x9000, scoped, tag = 'internal scratch']
  %s0 = inlined_call_operand.vmem [shape: bf16[2,128,128], index: 0, kind: input, shape index: {}]
  %s1 = inlined_call_operand.vmem [shape: bf16[2,128,32], index: 1, kind: input, shape index: {}]
  %s2 = inlined_call_operand.vmem [shape: f32[2,128,1], index: 2, kind: input, shape index: {}]
  %s3 = inlined_call_operand.vmem [shape: f32[2,8,128], index: 3, kind: input, shape index: {}]
  %s4 = inlined_call_operand.vmem [shape: bf16[32,32], index: 4, kind: input, shape index: {}]
  %s5 = inlined_call_operand.vmem [shape: bf16[32,32], index: 5, kind: input, shape index: {}]
  %s6 = inlined_call_operand.vmem [shape: bf16[32,32], index: 6, kind: input, shape index: {}]
  %s7 = inlined_call_operand.vmem [shape: f32[1,1,32], index: 7, kind: input, shape index: {}]
  %s8 = inlined_call_operand.vmem [shape: f32[1,1,32], index: 8, kind: input, shape index: {}]
  %s9 = inlined_call_operand.vmem [shape: f32[1,1,32], index: 9, kind: input, shape index: {}]
  %s10 = inlined_call_operand.vmem [shape: f32[2,8,32], index: 10, kind: output, shape index: {}]
  %s11 = sld [smem:[#allocation0]]
  $region73: #{gcn_forward.1} parent=0
    _
  %s13 = ssub.s32 1, %s11
  %s14 = scalar_select 0, %s13, %s11
  loop: start=0, step=1, limit=4
  $region2: #{gcn_forward.1} parent=0 // loop_pre_header
    _
  $region3: #{gcn_forward.1} parent=0 // loop_header
    %s16 = sphi 0, %s20
    %p17 = scmp.ge.s32.totalorder %s16, 4
    %s26 = sphi 0, %s28
    %s29 = sphi 0, %s26
    %s30 = sphi 0, %s29
    %s46 = sphi 0, %s30
    %s52 = sphi 0, %s54
    %s55 = sphi 0, %s52
    %s56 = sphi 0, %s55
    %s72 = sphi 0, %s56
    %s78 = sphi 0, %s80
    %s81 = sphi 0, %s78
    %s82 = sphi 0, %s81
    %s98 = sphi 0, %s82
    %s104 = sphi 0, %s106
    %s107 = sphi 0, %s104
    %s108 = sphi 0, %s107
    %s124 = sphi 0, %s108
    %s128 = sphi 0, %s128
    %s130 = sphi 0, %s128
    %s131 = sphi 0, %s130
    %s145 = sphi 0, %s131
    %s149 = sphi 0, %s149
    %s151 = sphi 0, %s149
    %s152 = sphi 0, %s151
    %s166 = sphi 0, %s152
    %s170 = sphi 0, %s170
    %s172 = sphi 0, %s170
    %s173 = sphi 0, %s172
    %s187 = sphi 0, %s173
    %s191 = sphi 0, %s191
    %s193 = sphi 0, %s191
    %s194 = sphi 0, %s193
    %s208 = sphi 0, %s194
    %s212 = sphi 0, %s212
    %s214 = sphi 0, %s212
    %s215 = sphi 0, %s214
    %s229 = sphi 0, %s215
    %s233 = sphi 0, %s233
    %s235 = sphi 0, %s233
    %s236 = sphi 0, %s235
    %s250 = sphi 0, %s236
    %s256 = sphi 0, %s258
    %s259 = sphi 0, %s256
    %s260 = sphi 0, %s259
    %s276 = sphi 0, %s260
  $region4: #{gcn_forward.1} parent=0 // loop_header_branch
    %19 = sbr.rel (%p17) target = $region8
  $region5: #{gcn_forward.1} parent=0 // loop_body
    %s21 = ssub.s32 %s16, 1
    %s22 = ssub.s32 %s16, 2
    %s23 = sadd.s32 %s16, 1
    %s24 = ssub.s32 %s16, %s23
    %p25 = scmp.eq.s32.totalorder %s24, 0
    %s27 = sadd.s32 %s26, 1
    %s28 = scalar_select %p25, %s26, %s27
    %p31 = pneg %p25
    %p32 = scmp.eq.s32.totalorder %s16, 1
    %p33 = por %p31, %p32
    %p34 = scmp.ne.s32.totalorder %s26, %s29
    %p35 = scmp.eq.s32.totalorder %s16, 0
    %p36 = por %p34, %p35
    %p37 = scmp.ne.s32.totalorder %s26, %s29
    %p38 = scmp.eq.s32.totalorder %s21, 1
    %p39 = por %p37, %p38
    %p40 = scmp.ne.s32.totalorder %s29, %s30
    %p41 = scmp.eq.s32.totalorder %s21, 0
    %p42 = por %p40, %p41
    %p43 = scmp.ne.s32.totalorder %s29, %s30
    %p44 = scmp.eq.s32.totalorder %s22, 1
    %p45 = por %p43, %p44
    %p47 = scmp.ne.s32.totalorder %s30, %s46
    %p48 = scmp.eq.s32.totalorder %s22, 0
    %p49 = por %p47, %p48
    %s50 = ssub.s32 %s16, %s23
    %p51 = scmp.eq.s32.totalorder %s50, 0
    %s53 = sadd.s32 %s52, 1
    %s54 = scalar_select %p51, %s52, %s53
    %p57 = pneg %p51
    %p58 = scmp.eq.s32.totalorder %s16, 1
    %p59 = por %p57, %p58
    %p60 = scmp.ne.s32.totalorder %s52, %s55
    %p61 = scmp.eq.s32.totalorder %s16, 0
    %p62 = por %p60, %p61
    %p63 = scmp.ne.s32.totalorder %s52, %s55
    %p64 = scmp.eq.s32.totalorder %s21, 1
    %p65 = por %p63, %p64
    %p66 = scmp.ne.s32.totalorder %s55, %s56
    %p67 = scmp.eq.s32.totalorder %s21, 0
    %p68 = por %p66, %p67
    %p69 = scmp.ne.s32.totalorder %s55, %s56
    %p70 = scmp.eq.s32.totalorder %s22, 1
    %p71 = por %p69, %p70
    %p73 = scmp.ne.s32.totalorder %s56, %s72
    %p74 = scmp.eq.s32.totalorder %s22, 0
    %p75 = por %p73, %p74
    %s76 = ssub.s32 %s16, %s23
    %p77 = scmp.eq.s32.totalorder %s76, 0
    %s79 = sadd.s32 %s78, 1
    %s80 = scalar_select %p77, %s78, %s79
    %p83 = pneg %p77
    %p84 = scmp.eq.s32.totalorder %s16, 1
    %p85 = por %p83, %p84
    %p86 = scmp.ne.s32.totalorder %s78, %s81
    %p87 = scmp.eq.s32.totalorder %s16, 0
    %p88 = por %p86, %p87
    %p89 = scmp.ne.s32.totalorder %s78, %s81
    %p90 = scmp.eq.s32.totalorder %s21, 1
    %p91 = por %p89, %p90
    %p92 = scmp.ne.s32.totalorder %s81, %s82
    %p93 = scmp.eq.s32.totalorder %s21, 0
    %p94 = por %p92, %p93
    %p95 = scmp.ne.s32.totalorder %s81, %s82
    %p96 = scmp.eq.s32.totalorder %s22, 1
    %p97 = por %p95, %p96
    %p99 = scmp.ne.s32.totalorder %s82, %s98
    %p100 = scmp.eq.s32.totalorder %s22, 0
    %p101 = por %p99, %p100
    %s102 = ssub.s32 %s16, %s23
    %p103 = scmp.eq.s32.totalorder %s102, 0
    %s105 = sadd.s32 %s104, 1
    %s106 = scalar_select %p103, %s104, %s105
    %p109 = pneg %p103
    %p110 = scmp.eq.s32.totalorder %s16, 1
    %p111 = por %p109, %p110
    %p112 = scmp.ne.s32.totalorder %s104, %s107
    %p113 = scmp.eq.s32.totalorder %s16, 0
    %p114 = por %p112, %p113
    %p115 = scmp.ne.s32.totalorder %s104, %s107
    %p116 = scmp.eq.s32.totalorder %s21, 1
    %p117 = por %p115, %p116
    %p118 = scmp.ne.s32.totalorder %s107, %s108
    %p119 = scmp.eq.s32.totalorder %s21, 0
    %p120 = por %p118, %p119
    %p121 = scmp.ne.s32.totalorder %s107, %s108
    %p122 = scmp.eq.s32.totalorder %s22, 1
    %p123 = por %p121, %p122
    %p125 = scmp.ne.s32.totalorder %s108, %s124
    %p126 = scmp.eq.s32.totalorder %s22, 0
    %p127 = por %p125, %p126
    %s129 = sadd.s32 %s128, 1
    %p132 = scmp.eq.s32.totalorder %s16, 1
    %p133 = scmp.ne.s32.totalorder %s128, %s130
    %p134 = scmp.eq.s32.totalorder %s16, 0
    %p135 = por %p133, %p134
    %p136 = scmp.ne.s32.totalorder %s128, %s130
    %p137 = scmp.eq.s32.totalorder %s21, 1
    %p138 = por %p136, %p137
    %p139 = scmp.ne.s32.totalorder %s130, %s131
    %p140 = scmp.eq.s32.totalorder %s21, 0
    %p141 = por %p139, %p140
    %p142 = scmp.ne.s32.totalorder %s130, %s131
    %p143 = scmp.eq.s32.totalorder %s22, 1
    %p144 = por %p142, %p143
    %p146 = scmp.ne.s32.totalorder %s131, %s145
    %p147 = scmp.eq.s32.totalorder %s22, 0
    %p148 = por %p146, %p147
    %s150 = sadd.s32 %s149, 1
    %p153 = scmp.eq.s32.totalorder %s16, 1
    %p154 = scmp.ne.s32.totalorder %s149, %s151
    %p155 = scmp.eq.s32.totalorder %s16, 0
    %p156 = por %p154, %p155
    %p157 = scmp.ne.s32.totalorder %s149, %s151
    %p158 = scmp.eq.s32.totalorder %s21, 1
    %p159 = por %p157, %p158
    %p160 = scmp.ne.s32.totalorder %s151, %s152
    %p161 = scmp.eq.s32.totalorder %s21, 0
    %p162 = por %p160, %p161
    %p163 = scmp.ne.s32.totalorder %s151, %s152
    %p164 = scmp.eq.s32.totalorder %s22, 1
    %p165 = por %p163, %p164
    %p167 = scmp.ne.s32.totalorder %s152, %s166
    %p168 = scmp.eq.s32.totalorder %s22, 0
    %p169 = por %p167, %p168
    %s171 = sadd.s32 %s170, 1
    %p174 = scmp.eq.s32.totalorder %s16, 1
    %p175 = scmp.ne.s32.totalorder %s170, %s172
    %p176 = scmp.eq.s32.totalorder %s16, 0
    %p177 = por %p175, %p176
    %p178 = scmp.ne.s32.totalorder %s170, %s172
    %p179 = scmp.eq.s32.totalorder %s21, 1
    %p180 = por %p178, %p179
    %p181 = scmp.ne.s32.totalorder %s172, %s173
    %p182 = scmp.eq.s32.totalorder %s21, 0
    %p183 = por %p181, %p182
    %p184 = scmp.ne.s32.totalorder %s172, %s173
    %p185 = scmp.eq.s32.totalorder %s22, 1
    %p186 = por %p184, %p185
    %p188 = scmp.ne.s32.totalorder %s173, %s187
    %p189 = scmp.eq.s32.totalorder %s22, 0
    %p190 = por %p188, %p189
    %s192 = sadd.s32 %s191, 1
    %p195 = scmp.eq.s32.totalorder %s16, 1
    %p196 = scmp.ne.s32.totalorder %s191, %s193
    %p197 = scmp.eq.s32.totalorder %s16, 0
    %p198 = por %p196, %p197
    %p199 = scmp.ne.s32.totalorder %s191, %s193
    %p200 = scmp.eq.s32.totalorder %s21, 1
    %p201 = por %p199, %p200
    %p202 = scmp.ne.s32.totalorder %s193, %s194
    %p203 = scmp.eq.s32.totalorder %s21, 0
    %p204 = por %p202, %p203
    %p205 = scmp.ne.s32.totalorder %s193, %s194
    %p206 = scmp.eq.s32.totalorder %s22, 1
    %p207 = por %p205, %p206
    %p209 = scmp.ne.s32.totalorder %s194, %s208
    %p210 = scmp.eq.s32.totalorder %s22, 0
    %p211 = por %p209, %p210
    %s213 = sadd.s32 %s212, 1
    %p216 = scmp.eq.s32.totalorder %s16, 1
    %p217 = scmp.ne.s32.totalorder %s212, %s214
    %p218 = scmp.eq.s32.totalorder %s16, 0
    %p219 = por %p217, %p218
    %p220 = scmp.ne.s32.totalorder %s212, %s214
    %p221 = scmp.eq.s32.totalorder %s21, 1
    %p222 = por %p220, %p221
    %p223 = scmp.ne.s32.totalorder %s214, %s215
    %p224 = scmp.eq.s32.totalorder %s21, 0
    %p225 = por %p223, %p224
    %p226 = scmp.ne.s32.totalorder %s214, %s215
    %p227 = scmp.eq.s32.totalorder %s22, 1
    %p228 = por %p226, %p227
    %p230 = scmp.ne.s32.totalorder %s215, %s229
    %p231 = scmp.eq.s32.totalorder %s22, 0
    %p232 = por %p230, %p231
    %s234 = sadd.s32 %s233, 1
    %p237 = scmp.eq.s32.totalorder %s16, 1
    %p238 = scmp.ne.s32.totalorder %s233, %s235
    %p239 = scmp.eq.s32.totalorder %s16, 0
    %p240 = por %p238, %p239
    %p241 = scmp.ne.s32.totalorder %s233, %s235
    %p242 = scmp.eq.s32.totalorder %s21, 1
    %p243 = por %p241, %p242
    %p244 = scmp.ne.s32.totalorder %s235, %s236
    %p245 = scmp.eq.s32.totalorder %s21, 0
    %p246 = por %p244, %p245
    %p247 = scmp.ne.s32.totalorder %s235, %s236
    %p248 = scmp.eq.s32.totalorder %s22, 1
    %p249 = por %p247, %p248
    %p251 = scmp.ne.s32.totalorder %s236, %s250
    %p252 = scmp.eq.s32.totalorder %s22, 0
    %p253 = por %p251, %p252
    %s254 = ssub.s32 %s16, %s23
    %p255 = scmp.eq.s32.totalorder %s254, 0
    %s257 = sadd.s32 %s256, 1
    %s258 = scalar_select %p255, %s256, %s257
    %p261 = pneg %p255
    %p262 = scmp.eq.s32.totalorder %s16, 1
    %p263 = por %p261, %p262
    %p264 = scmp.ne.s32.totalorder %s256, %s259
    %p265 = scmp.eq.s32.totalorder %s16, 0
    %p266 = por %p264, %p265
    %p267 = scmp.ne.s32.totalorder %s256, %s259
    %p268 = scmp.eq.s32.totalorder %s21, 1
    %p269 = por %p267, %p268
    %p270 = scmp.ne.s32.totalorder %s259, %s260
    %p271 = scmp.eq.s32.totalorder %s21, 0
    %p272 = por %p270, %p271
    %p273 = scmp.ne.s32.totalorder %s259, %s260
    %p274 = scmp.eq.s32.totalorder %s22, 1
    %p275 = por %p273, %p274
    %p277 = scmp.ne.s32.totalorder %s260, %s276
    %p278 = scmp.eq.s32.totalorder %s22, 0
    %p279 = por %p277, %p278
    %p280 = scmp.le.s32.totalorder 1, %s16
    %p281 = scmp.lt.s32.totalorder %s16, 3
    %p282 = pnand %p280, %p281
    %p283 = pneg %p282
    // Predicated region
    $region9: #{gcn_forward.1} parent=5 // pred_check
      _
    $region10: #{gcn_forward.1} parent=5 // pred_check_branch
      %285 = sbr.rel (%p282) target = $region12
    $region11: #{gcn_forward.1} parent=5 // pred_region
      %s286 = ssub.s32 %s16, 1
      // Predicated region
      $region13: #{gcn_forward.1} parent=11 // pred_check
        %p287 = pneg %p141
      $region14: #{gcn_forward.1} parent=11 // pred_check_branch
        %289 = sbr.rel (%p287) target = $region16
      $region15: #{gcn_forward.1} parent=11 // pred_region
        _
      $region16: #{gcn_forward.1} parent=11 // pred_fallthru
        _
      // Predicated region
      $region17: #{gcn_forward.1} parent=11 // pred_check
        %p290 = pneg %p162
      $region18: #{gcn_forward.1} parent=11 // pred_check_branch
        %292 = sbr.rel (%p290) target = $region20
      $region19: #{gcn_forward.1} parent=11 // pred_region
        _
      $region20: #{gcn_forward.1} parent=11 // pred_fallthru
        _
      // Predicated region
      $region21: #{gcn_forward.1} parent=11 // pred_check
        %p293 = pneg %p183
      $region22: #{gcn_forward.1} parent=11 // pred_check_branch
        %295 = sbr.rel (%p293) target = $region24
      $region23: #{gcn_forward.1} parent=11 // pred_region
        _
      $region24: #{gcn_forward.1} parent=11 // pred_fallthru
        _
      // Predicated region
      $region25: #{gcn_forward.1} parent=11 // pred_check
        %p296 = pneg %p204
      $region26: #{gcn_forward.1} parent=11 // pred_check_branch
        %298 = sbr.rel (%p296) target = $region28
      $region27: #{gcn_forward.1} parent=11 // pred_region
        _
      $region28: #{gcn_forward.1} parent=11 // pred_fallthru
        _
      // Predicated region
      $region29: #{gcn_forward.1} parent=11 // pred_check
        %p299 = pneg %p225
      $region30: #{gcn_forward.1} parent=11 // pred_check_branch
        %301 = sbr.rel (%p299) target = $region32
      $region31: #{gcn_forward.1} parent=11 // pred_region
        _
      $region32: #{gcn_forward.1} parent=11 // pred_fallthru
        _
      // Predicated region
      $region33: #{gcn_forward.1} parent=11 // pred_check
        %p302 = pneg %p246
      $region34: #{gcn_forward.1} parent=11 // pred_check_branch
        %304 = sbr.rel (%p302) target = $region36
      $region35: #{gcn_forward.1} parent=11 // pred_region
        _
      $region36: #{gcn_forward.1} parent=11 // pred_fallthru
        _
    $region12: #{gcn_forward.1} parent=5 // pred_fallthru
      _
    %p305 = scmp.lt.s32.totalorder %s16, 2
    // Predicated region
    $region37: #{gcn_forward.1} parent=5 // pred_check
      %p306 = pneg %p305
    $region38: #{gcn_forward.1} parent=5 // pred_check_branch
      %308 = sbr.rel (%p306) target = $region40
    $region39: #{gcn_forward.1} parent=5 // pred_region
      // Predicated region
      $region41: #{gcn_forward.1} parent=39 // pred_check
        %p309 = pneg %p36
      $region42: #{gcn_forward.1} parent=39 // pred_check_branch
        %311 = sbr.rel (%p309) target = $region44
      $region43: #{gcn_forward.1} parent=39 // pred_region
        %p312 = scmp.lt.s32.totalorder %s16, 1
        %s313 = scalar_select %p312, %s16, 1
        %s314 = smul.addr %s313, 16
        %s315 = smul.addr %s314, 4
        %s316 = scalar_lea.vmem %s0, %s315
      $region44: #{gcn_forward.1} parent=39 // pred_fallthru
        _
      // Predicated region
      $region45: #{gcn_forward.1} parent=39 // pred_check
        %p317 = pneg %p62
      $region46: #{gcn_forward.1} parent=39 // pred_check_branch
        %319 = sbr.rel (%p317) target = $region48
      $region47: #{gcn_forward.1} parent=39 // pred_region
        %p320 = scmp.lt.s32.totalorder %s16, 1
        %s321 = scalar_select %p320, %s16, 1
        %s322 = smul.addr %s321, 16
        %s323 = smul.addr %s322, 4
        %s324 = scalar_lea.vmem %s1, %s323
      $region48: #{gcn_forward.1} parent=39 // pred_fallthru
        _
      // Predicated region
      $region49: #{gcn_forward.1} parent=39 // pred_check
        %p325 = pneg %p88
      $region50: #{gcn_forward.1} parent=39 // pred_check_branch
        %327 = sbr.rel (%p325) target = $region52
      $region51: #{gcn_forward.1} parent=39 // pred_region
        %p328 = scmp.lt.s32.totalorder %s16, 1
        %s329 = scalar_select %p328, %s16, 1
        %s330 = smul.addr %s329, 16
        %s331 = smul.addr %s330, 8
        %s332 = scalar_lea.vmem %s2, %s331
      $region52: #{gcn_forward.1} parent=39 // pred_fallthru
        _
      // Predicated region
      $region53: #{gcn_forward.1} parent=39 // pred_check
        %p333 = pneg %p114
      $region54: #{gcn_forward.1} parent=39 // pred_check_branch
        %335 = sbr.rel (%p333) target = $region56
      $region55: #{gcn_forward.1} parent=39 // pred_region
        %p336 = scmp.lt.s32.totalorder %s16, 1
        %s337 = scalar_select %p336, %s16, 1
        %s338 = smul.addr %s337, 8
        %s339 = scalar_lea.vmem %s3, %s338
      $region56: #{gcn_forward.1} parent=39 // pred_fallthru
        _
    $region40: #{gcn_forward.1} parent=5 // pred_fallthru
      _
    %p340 = scmp.le.s32.totalorder 1, %s16
    %p341 = scmp.lt.s32.totalorder %s16, 3
    %p342 = pnand %p340, %p341
    %p343 = pneg %p342
    // Predicated region
    $region57: #{gcn_forward.1} parent=5 // pred_check
      _
    $region58: #{gcn_forward.1} parent=5 // pred_check_branch
      %345 = sbr.rel (%p342) target = $region60
    $region59: #{gcn_forward.1} parent=5 // pred_region
      %s346 = ssub.s32 %s16, 1
      %p347 = scmp.lt.s32.totalorder %s21, 1
      %s348 = scalar_select %p347, %s21, 1
      %s349 = smul.addr %s348, 16
      %s350 = smul.addr %s349, 4
      %s351 = scalar_lea.vmem %s0, %s350
      %p352 = pneg %p42
      %p353 = pneg %p39
      %p354 = scmp.lt.s32.totalorder %s21, 1
      %s355 = scalar_select %p354, %s21, 1
      %s356 = smul.addr %s355, 16
      %s357 = smul.addr %s356, 4
      %s358 = scalar_lea.vmem %s1, %s357
      %p359 = pneg %p68
      %p360 = pneg %p65
      %p361 = scmp.lt.s32.totalorder %s21, 1
      %s362 = scalar_select %p361, %s21, 1
      %s363 = smul.addr %s362, 16
      %s364 = smul.addr %s363, 8
      %s365 = scalar_lea.vmem %s2, %s364
      %p366 = pneg %p94
      %p367 = pneg %p91
      %p368 = scmp.lt.s32.totalorder %s21, 1
      %s369 = scalar_select %p368, %s21, 1
      %s370 = smul.addr %s369, 8
      %s371 = scalar_lea.vmem %s3, %s370
      %p372 = pneg %p120
      %p373 = pneg %p117
      %p374 = pneg %p141
      %p375 = pneg %p138
      %p376 = pneg %p162
      %p377 = pneg %p159
      %p378 = pneg %p183
      %p379 = pneg %p180
      %p380 = pneg %p204
      %p381 = pneg %p201
      %p382 = pneg %p225
      %p383 = pneg %p222
      %p384 = pneg %p246
      %p385 = pneg %p243
      %p386 = pneg %p272
      %p387 = pneg %p269
      %p388 = scmp.lt.s32.totalorder %s21, 1
      %s389 = scalar_select %p388, %s21, 1
      %s390 = smul.addr %s389, 8
      %s391 = scalar_lea.vmem %s10, %s390
      %p392 = scmp.lt.s32.totalorder %s21, 1
      %s393 = scalar_select %p392, %s21, 1
      %s394 = smul.addr %s393, 16
      %s395 = smul.addr %s394, 4
      %s396 = scalar_lea.vmem %s0, %s395
      %p397 = scmp.lt.s32.totalorder %s21, 1
      %s398 = scalar_select %p397, %s21, 1
      %s399 = smul.addr %s398, 16
      %s400 = smul.addr %s399, 4
      %s401 = scalar_lea.vmem %s1, %s400
      %p402 = scmp.lt.s32.totalorder %s21, 1
      %s403 = scalar_select %p402, %s21, 1
      %s404 = smul.addr %s403, 16
      %s405 = smul.addr %s404, 8
      %s406 = scalar_lea.vmem %s2, %s405
      %p407 = scmp.lt.s32.totalorder %s21, 1
      %s408 = scalar_select %p407, %s21, 1
      %s409 = smul.addr %s408, 8
      %s410 = scalar_lea.vmem %s3, %s409
      %p411 = scmp.lt.s32.totalorder %s21, 1
      %s412 = scalar_select %p411, %s21, 1
      %s413 = smul.addr %s412, 8
      %s414 = scalar_lea.vmem %s10, %s413
      %v416 = vld [vmem:[%s396] sm:$0xf]
      %v417 = vld [vmem:[%s396 + $0x4] sm:$0xf]
      %v418 = vld [vmem:[%s396 + $0x8] sm:$0xf]
      %v419 = vld [vmem:[%s396 + $0xc] sm:$0xf]
      %v420 = vld [vmem:[%s396 + $0x10] sm:$0xf]
      %v421 = vld [vmem:[%s396 + $0x14] sm:$0xf]
      %v422 = vld [vmem:[%s396 + $0x18] sm:$0xf]
      %v423 = vld [vmem:[%s396 + $0x1c] sm:$0xf]
      %v424 = vld [vmem:[%s396 + $0x20] sm:$0xf]
      %v425 = vld [vmem:[%s396 + $0x24] sm:$0xf]
      %v426 = vld [vmem:[%s396 + $0x28] sm:$0xf]
      %v427 = vld [vmem:[%s396 + $0x2c] sm:$0xf]
      %v428 = vld [vmem:[%s396 + $0x30] sm:$0xf]
      %v429 = vld [vmem:[%s396 + $0x34] sm:$0xf]
      %v430 = vld [vmem:[%s396 + $0x38] sm:$0xf]
      %v431 = vld [vmem:[%s396 + $0x3c] sm:$0xf]
      %v432 = vld [vmem:[%s406] sm:$0xff]
      %v433 = vld [vmem:[%s406 + $0x8] sm:$0xff]
      %v434 = vld [vmem:[%s406 + $0x10] sm:$0xff]
      %v435 = vld [vmem:[%s406 + $0x18] sm:$0xff]
      %v436 = vld [vmem:[%s406 + $0x20] sm:$0xff]
      %v437 = vld [vmem:[%s406 + $0x28] sm:$0xff]
      %v438 = vld [vmem:[%s406 + $0x30] sm:$0xff]
      %v439 = vld [vmem:[%s406 + $0x38] sm:$0xff]
      %v440 = vld [vmem:[%s406 + $0x40] sm:$0xff]
      %v441 = vld [vmem:[%s406 + $0x48] sm:$0xff]
      %v442 = vld [vmem:[%s406 + $0x50] sm:$0xff]
      %v443 = vld [vmem:[%s406 + $0x58] sm:$0xff]
      %v444 = vld [vmem:[%s406 + $0x60] sm:$0xff]
      %v445 = vld [vmem:[%s406 + $0x68] sm:$0xff]
      %v446 = vld [vmem:[%s406 + $0x70] sm:$0xff]
      %v447 = vld [vmem:[%s406 + $0x78] sm:$0xff]
      %v448 = vld [vmem:[%s401] sm:$0xf]
      %v449 = vld [vmem:[%s401 + $0x4] sm:$0xf]
      %v450 = vld [vmem:[%s401 + $0x8] sm:$0xf]
      %v451 = vld [vmem:[%s401 + $0xc] sm:$0xf]
      %v452 = vld [vmem:[%s401 + $0x10] sm:$0xf]
      %v453 = vld [vmem:[%s401 + $0x14] sm:$0xf]
      %v454 = vld [vmem:[%s401 + $0x18] sm:$0xf]
      %v455 = vld [vmem:[%s401 + $0x1c] sm:$0xf]
      %v456 = vld [vmem:[%s401 + $0x20] sm:$0xf]
      %v457 = vld [vmem:[%s401 + $0x24] sm:$0xf]
      %v458 = vld [vmem:[%s401 + $0x28] sm:$0xf]
      %v459 = vld [vmem:[%s401 + $0x2c] sm:$0xf]
      %v460 = vld [vmem:[%s401 + $0x30] sm:$0xf]
      %v461 = vld [vmem:[%s401 + $0x34] sm:$0xf]
      %v462 = vld [vmem:[%s401 + $0x38] sm:$0xf]
      %v463 = vld [vmem:[%s401 + $0x3c] sm:$0xf]
      %v464 = vld [vmem:[%s4] sm:$0xf]
      %v465 = vld [vmem:[%s4 + $0x4] sm:$0xf]
      %v466 = vld [vmem:[%s4 + $0x8] sm:$0xf]
      %v467 = vld [vmem:[%s4 + $0xc] sm:$0xf]
      %v484 = vunpack.c.l.b16 %v448
      %v485 = vunpack.c.l.b16 %v449
      %v486 = vunpack.c.l.b16 %v450
      %v487 = vunpack.c.l.b16 %v451
      %v488 = vunpack.c.l.b16 %v452
      %v489 = vunpack.c.l.b16 %v453
      %v490 = vunpack.c.l.b16 %v454
      %v491 = vunpack.c.l.b16 %v455
      %v492 = vunpack.c.l.b16 %v456
      %v493 = vunpack.c.l.b16 %v457
      %v494 = vunpack.c.l.b16 %v458
      %v495 = vunpack.c.l.b16 %v459
      %v496 = vunpack.c.l.b16 %v460
      %v497 = vunpack.c.l.b16 %v461
      %v498 = vunpack.c.l.b16 %v462
      %v499 = vunpack.c.l.b16 %v463
      %v500 = vpack.c.b16 %v485, %v484
      %v501 = vpack.c.b16 %v487, %v486
      %v502 = vpack.c.b16 %v489, %v488
      %v503 = vpack.c.b16 %v491, %v490
      %v504 = vpack.c.b16 %v493, %v492
      %v505 = vpack.c.b16 %v495, %v494
      %v506 = vpack.c.b16 %v497, %v496
      %v507 = vpack.c.b16 %v499, %v498
      %v512 = vunpack.c.l.b16 %v464
      %v513 = vunpack.c.l.b16 %v465
      %v514 = vunpack.c.l.b16 %v466
      %v515 = vunpack.c.l.b16 %v467
      %v516 = vpack.c.b16 %v513, %v512
      %v517 = vpack.c.b16 %v515, %v514
      %vm520 = vcmask 261120
      %v522 = vsel %vm520, %v500, 0
      %v525 = vsel %vm520, %v501, 0
      %v528 = vsel %vm520, %v502, 0
      %v531 = vsel %vm520, %v503, 0
      %v534 = vsel %vm520, %v504, 0
      %v537 = vsel %vm520, %v505, 0
      %v540 = vsel %vm520, %v506, 0
      %v543 = vsel %vm520, %v507, 0
      %545 = vmatpush.bf16.msra.mxu0 0
      %546 = vmatpush.bf16.msra.mxu0 0
      %547 = vmatpush.bf16.msra.mxu0 0
      %548 = vmatpush.bf16.msra.mxu0 0
      %549 = vmatpush.bf16.msra.mxu0 0
      %550 = vmatpush.bf16.msra.mxu0 0
      %551 = vmatpush.bf16.msra.mxu0 %v517
      %552 = vmatpush.bf16.msra.mxu0 %v516
      %553 = vmatmul.bf16.gmra.mxu0 %v522
      %v554 = vpop.f32.mrf.mxu0
      %v555 = vadd.f32 0.0, %v554
      %v556 = vpop.f32.mrf.mxu0
      %v557 = vadd.f32 0.0, %v556
      %558 = vmatmul.bf16.gmra.mxu0 %v525
      %v559 = vpop.f32.mrf.mxu0
      %v560 = vadd.f32 0.0, %v559
      %v561 = vpop.f32.mrf.mxu0
      %v562 = vadd.f32 0.0, %v561
      %563 = vmatmul.bf16.gmra.mxu0 %v528
      %v564 = vpop.f32.mrf.mxu0
      %v565 = vadd.f32 0.0, %v564
      %v566 = vpop.f32.mrf.mxu0
      %v567 = vadd.f32 0.0, %v566
      %568 = vmatmul.bf16.gmra.mxu0 %v531
      %v569 = vpop.f32.mrf.mxu0
      %v570 = vadd.f32 0.0, %v569
      %v571 = vpop.f32.mrf.mxu0
      %v572 = vadd.f32 0.0, %v571
      %573 = vmatmul.bf16.gmra.mxu0 %v534
      %v574 = vpop.f32.mrf.mxu0
      %v575 = vadd.f32 0.0, %v574
      %v576 = vpop.f32.mrf.mxu0
      %v577 = vadd.f32 0.0, %v576
      %578 = vmatmul.bf16.gmra.mxu0 %v537
      %v579 = vpop.f32.mrf.mxu0
      %v580 = vadd.f32 0.0, %v579
      %v581 = vpop.f32.mrf.mxu0
      %v582 = vadd.f32 0.0, %v581
      %583 = vmatmul.bf16.gmra.mxu0 %v540
      %v584 = vpop.f32.mrf.mxu0
      %v585 = vadd.f32 0.0, %v584
      %v586 = vpop.f32.mrf.mxu0
      %v587 = vadd.f32 0.0, %v586
      %588 = vmatmul.bf16.gmra.mxu0 %v543
      %v589 = vpop.f32.mrf.mxu0
      %v590 = vadd.f32 0.0, %v589
      %v591 = vpop.f32.mrf.mxu0
      %v592 = vadd.f32 0.0, %v591
      %593 = vdwg.mxu0
      %595 = vset.pattern.permute.xlu0 0
      %596 = vperm.xlu0 %595, %v432
      %v597 = vpop.permute.xlu0 %596
      %600 = vset.pattern.permute.xlu0 0
      %601 = vperm.xlu0 %600, %v433
      %v602 = vpop.permute.xlu0 %601
      %605 = vset.pattern.permute.xlu0 0
      %606 = vperm.xlu0 %605, %v434
      %v607 = vpop.permute.xlu0 %606
      %610 = vset.pattern.permute.xlu0 0
      %611 = vperm.xlu0 %610, %v435
      %v612 = vpop.permute.xlu0 %611
      %615 = vset.pattern.permute.xlu0 0
      %616 = vperm.xlu0 %615, %v436
      %v617 = vpop.permute.xlu0 %616
      %620 = vset.pattern.permute.xlu0 0
      %621 = vperm.xlu0 %620, %v437
      %v622 = vpop.permute.xlu0 %621
      %625 = vset.pattern.permute.xlu0 0
      %626 = vperm.xlu0 %625, %v438
      %v627 = vpop.permute.xlu0 %626
      %630 = vset.pattern.permute.xlu0 0
      %631 = vperm.xlu0 %630, %v439
      %v632 = vpop.permute.xlu0 %631
      %635 = vset.pattern.permute.xlu0 0
      %636 = vperm.xlu0 %635, %v440
      %v637 = vpop.permute.xlu0 %636
      %640 = vset.pattern.permute.xlu0 0
      %641 = vperm.xlu0 %640, %v441
      %v642 = vpop.permute.xlu0 %641
      %645 = vset.pattern.permute.xlu0 0
      %646 = vperm.xlu0 %645, %v442
      %v647 = vpop.permute.xlu0 %646
      %650 = vset.pattern.permute.xlu0 0
      %651 = vperm.xlu0 %650, %v443
      %v652 = vpop.permute.xlu0 %651
      %655 = vset.pattern.permute.xlu0 0
      %656 = vperm.xlu0 %655, %v444
      %v657 = vpop.permute.xlu0 %656
      %660 = vset.pattern.permute.xlu0 0
      %661 = vperm.xlu0 %660, %v445
      %v662 = vpop.permute.xlu0 %661
      %665 = vset.pattern.permute.xlu0 0
      %666 = vperm.xlu0 %665, %v446
      %v667 = vpop.permute.xlu0 %666
      %670 = vset.pattern.permute.xlu0 0
      %671 = vperm.xlu0 %670, %v447
      %v672 = vpop.permute.xlu0 %671
      %v674 = vmul.f32 %v555, %v597
      %v675 = vmul.f32 %v557, %v602
      %v676 = vmul.f32 %v560, %v607
      %v677 = vmul.f32 %v562, %v612
      %v678 = vmul.f32 %v565, %v617
      %v679 = vmul.f32 %v567, %v622
      %v680 = vmul.f32 %v570, %v627
      %v681 = vmul.f32 %v572, %v632
      %v682 = vmul.f32 %v575, %v637
      %v683 = vmul.f32 %v577, %v642
      %v684 = vmul.f32 %v580, %v647
      %v685 = vmul.f32 %v582, %v652
      %v686 = vmul.f32 %v585, %v657
      %v687 = vmul.f32 %v587, %v662
      %v688 = vmul.f32 %v590, %v667
      %v689 = vmul.f32 %v592, %v672
      %v690 = vpack.c.bf16 %v674, %v674
      %v691 = vpack.c.bf16 %v675, %v675
      %v692 = vpack.c.bf16 %v676, %v676
      %v693 = vpack.c.bf16 %v677, %v677
      %v694 = vpack.c.bf16 %v678, %v678
      %v695 = vpack.c.bf16 %v679, %v679
      %v696 = vpack.c.bf16 %v680, %v680
      %v697 = vpack.c.bf16 %v681, %v681
      %v698 = vpack.c.bf16 %v682, %v682
      %v699 = vpack.c.bf16 %v683, %v683
      %v700 = vpack.c.bf16 %v684, %v684
      %v701 = vpack.c.bf16 %v685, %v685
      %v702 = vpack.c.bf16 %v686, %v686
      %v703 = vpack.c.bf16 %v687, %v687
      %v704 = vpack.c.bf16 %v688, %v688
      %v705 = vpack.c.bf16 %v689, %v689
      %v722 = vunpack.c.l.b16 %v416
      %v723 = vunpack.c.l.b16 %v417
      %v724 = vunpack.c.l.b16 %v418
      %v725 = vunpack.c.l.b16 %v419
      %v726 = vunpack.c.l.b16 %v420
      %v727 = vunpack.c.l.b16 %v421
      %v728 = vunpack.c.l.b16 %v422
      %v729 = vunpack.c.l.b16 %v423
      %v730 = vunpack.c.l.b16 %v424
      %v731 = vunpack.c.l.b16 %v425
      %v732 = vunpack.c.l.b16 %v426
      %v733 = vunpack.c.l.b16 %v427
      %v734 = vunpack.c.l.b16 %v428
      %v735 = vunpack.c.l.b16 %v429
      %v736 = vunpack.c.l.b16 %v430
      %v737 = vunpack.c.l.b16 %v431
      %v738 = vpack.c.b16 %v723, %v722
      %v739 = vpack.c.b16 %v725, %v724
      %v740 = vpack.c.b16 %v727, %v726
      %v741 = vpack.c.b16 %v729, %v728
      %v742 = vpack.c.b16 %v731, %v730
      %v743 = vpack.c.b16 %v733, %v732
      %v744 = vpack.c.b16 %v735, %v734
      %v745 = vpack.c.b16 %v737, %v736
      %v770 = vunpack.c.l.b16 %v690
      %v771 = vunpack.c.l.b16 %v691
      %v772 = vunpack.c.l.b16 %v692
      %v773 = vunpack.c.l.b16 %v693
      %v774 = vunpack.c.l.b16 %v694
      %v775 = vunpack.c.l.b16 %v695
      %v776 = vunpack.c.l.b16 %v696
      %v777 = vunpack.c.l.b16 %v697
      %v778 = vunpack.c.l.b16 %v698
      %v779 = vunpack.c.l.b16 %v699
      %v780 = vunpack.c.l.b16 %v700
      %v781 = vunpack.c.l.b16 %v701
      %v782 = vunpack.c.l.b16 %v702
      %v783 = vunpack.c.l.b16 %v703
      %v784 = vunpack.c.l.b16 %v704
      %v785 = vunpack.c.l.b16 %v705
      %v786 = vpack.c.b16 %v771, %v770
      %v787 = vpack.c.b16 %v773, %v772
      %v788 = vpack.c.b16 %v775, %v774
      %v789 = vpack.c.b16 %v777, %v776
      %v790 = vpack.c.b16 %v779, %v778
      %v791 = vpack.c.b16 %v781, %v780
      %v792 = vpack.c.b16 %v783, %v782
      %v793 = vpack.c.b16 %v785, %v784
      %802 = vmatpush.bf16.msra.mxu0 %v793
      %803 = vmatpush.bf16.msra.mxu0 %v792
      %804 = vmatpush.bf16.msra.mxu0 %v791
      %805 = vmatpush.bf16.msra.mxu0 %v790
      %806 = vmatpush.bf16.msra.mxu0 %v789
      %807 = vmatpush.bf16.msra.mxu0 %v788
      %808 = vmatpush.bf16.msra.mxu0 %v787
      %809 = vmatpush.bf16.msra.mxu0 %v786
      %810 = vmatmul.bf16.gmra.mxu0 %v738
      %v811 = vpop.f32.mrf.mxu0
      %v812 = vadd.f32 0.0, %v811
      %v813 = vpop.f32.mrf.mxu0
      %v814 = vadd.f32 0.0, %v813
      %815 = vmatmul.bf16.gmra.mxu0 %v739
      %v816 = vpop.f32.mrf.mxu0
      %v817 = vadd.f32 0.0, %v816
      %v818 = vpop.f32.mrf.mxu0
      %v819 = vadd.f32 0.0, %v818
      %820 = vmatmul.bf16.gmra.mxu0 %v740
      %v821 = vpop.f32.mrf.mxu0
      %v822 = vadd.f32 0.0, %v821
      %v823 = vpop.f32.mrf.mxu0
      %v824 = vadd.f32 0.0, %v823
      %825 = vmatmul.bf16.gmra.mxu0 %v741
      %v826 = vpop.f32.mrf.mxu0
      %v827 = vadd.f32 0.0, %v826
      %v828 = vpop.f32.mrf.mxu0
      %v829 = vadd.f32 0.0, %v828
      %830 = vmatmul.bf16.gmra.mxu0 %v742
      %v831 = vpop.f32.mrf.mxu0
      %v832 = vadd.f32 0.0, %v831
      %v833 = vpop.f32.mrf.mxu0
      %v834 = vadd.f32 0.0, %v833
      %835 = vmatmul.bf16.gmra.mxu0 %v743
      %v836 = vpop.f32.mrf.mxu0
      %v837 = vadd.f32 0.0, %v836
      %v838 = vpop.f32.mrf.mxu0
      %v839 = vadd.f32 0.0, %v838
      %840 = vmatmul.bf16.gmra.mxu0 %v744
      %v841 = vpop.f32.mrf.mxu0
      %v842 = vadd.f32 0.0, %v841
      %v843 = vpop.f32.mrf.mxu0
      %v844 = vadd.f32 0.0, %v843
      %845 = vmatmul.bf16.gmra.mxu0 %v745
      %v846 = vpop.f32.mrf.mxu0
      %v847 = vadd.f32 0.0, %v846
      %v848 = vpop.f32.mrf.mxu0
      %v849 = vadd.f32 0.0, %v848
      %850 = vdwg.mxu0
      %v851 = vmul.f32 %v812, %v597
      %v852 = vmul.f32 %v814, %v602
      %v853 = vmul.f32 %v817, %v607
      %v854 = vmul.f32 %v819, %v612
      %v855 = vmul.f32 %v822, %v617
      %v856 = vmul.f32 %v824, %v622
      %v857 = vmul.f32 %v827, %v627
      %v858 = vmul.f32 %v829, %v632
      %v859 = vmul.f32 %v832, %v637
      %v860 = vmul.f32 %v834, %v642
      %v861 = vmul.f32 %v837, %v647
      %v862 = vmul.f32 %v839, %v652
      %v863 = vmul.f32 %v842, %v657
      %v864 = vmul.f32 %v844, %v662
      %v865 = vmul.f32 %v847, %v667
      %v866 = vmul.f32 %v849, %v672
      %v867 = vld [vmem:[%s7] sm:$0x1]
      %v869 = vperm.slane %v867, 0
      %v871 = vadd.f32 %v851, %v869
      %v872 = vadd.f32 %v852, %v869
      %v873 = vadd.f32 %v853, %v869
      %v874 = vadd.f32 %v854, %v869
      %v875 = vadd.f32 %v855, %v869
      %v876 = vadd.f32 %v856, %v869
      %v877 = vadd.f32 %v857, %v869
      %v878 = vadd.f32 %v858, %v869
      %v879 = vadd.f32 %v859, %v869
      %v880 = vadd.f32 %v860, %v869
      %v881 = vadd.f32 %v861, %v869
      %v882 = vadd.f32 %v862, %v869
      %v883 = vadd.f32 %v863, %v869
      %v884 = vadd.f32 %v864, %v869
      %v885 = vadd.f32 %v865, %v869
      %v886 = vadd.f32 %v866, %v869
      %v887 = vmax.f32 %v871, 0.0
      %v888 = vmax.f32 %v872, 0.0
      %v889 = vmax.f32 %v873, 0.0
      %v890 = vmax.f32 %v874, 0.0
      %v891 = vmax.f32 %v875, 0.0
      %v892 = vmax.f32 %v876, 0.0
      %v893 = vmax.f32 %v877, 0.0
      %v894 = vmax.f32 %v878, 0.0
      %v895 = vmax.f32 %v879, 0.0
      %v896 = vmax.f32 %v880, 0.0
      %v897 = vmax.f32 %v881, 0.0
      %v898 = vmax.f32 %v882, 0.0
      %v899 = vmax.f32 %v883, 0.0
      %v900 = vmax.f32 %v884, 0.0
      %v901 = vmax.f32 %v885, 0.0
      %v902 = vmax.f32 %v886, 0.0
      %v903 = vpack.c.bf16 %v887, %v887
      %v904 = vpack.c.bf16 %v888, %v888
      %v905 = vpack.c.bf16 %v889, %v889
      %v906 = vpack.c.bf16 %v890, %v890
      %v907 = vpack.c.bf16 %v891, %v891
      %v908 = vpack.c.bf16 %v892, %v892
      %v909 = vpack.c.bf16 %v893, %v893
      %v910 = vpack.c.bf16 %v894, %v894
      %v911 = vpack.c.bf16 %v895, %v895
      %v912 = vpack.c.bf16 %v896, %v896
      %v913 = vpack.c.bf16 %v897, %v897
      %v914 = vpack.c.bf16 %v898, %v898
      %v915 = vpack.c.bf16 %v899, %v899
      %v916 = vpack.c.bf16 %v900, %v900
      %v917 = vpack.c.bf16 %v901, %v901
      %v918 = vpack.c.bf16 %v902, %v902
      %v919 = vld [vmem:[%s5] sm:$0xf]
      %v920 = vld [vmem:[%s5 + $0x4] sm:$0xf]
      %v921 = vld [vmem:[%s5 + $0x8] sm:$0xf]
      %v922 = vld [vmem:[%s5 + $0xc] sm:$0xf]
      %v939 = vunpack.c.l.b16 %v903
      %v940 = vunpack.c.l.b16 %v904
      %v941 = vunpack.c.l.b16 %v905
      %v942 = vunpack.c.l.b16 %v906
      %v943 = vunpack.c.l.b16 %v907
      %v944 = vunpack.c.l.b16 %v908
      %v945 = vunpack.c.l.b16 %v909
      %v946 = vunpack.c.l.b16 %v910
      %v947 = vunpack.c.l.b16 %v911
      %v948 = vunpack.c.l.b16 %v912
      %v949 = vunpack.c.l.b16 %v913
      %v950 = vunpack.c.l.b16 %v914
      %v951 = vunpack.c.l.b16 %v915
      %v952 = vunpack.c.l.b16 %v916
      %v953 = vunpack.c.l.b16 %v917
      %v954 = vunpack.c.l.b16 %v918
      %v955 = vpack.c.b16 %v940, %v939
      %v956 = vpack.c.b16 %v942, %v941
      %v957 = vpack.c.b16 %v944, %v943
      %v958 = vpack.c.b16 %v946, %v945
      %v959 = vpack.c.b16 %v948, %v947
      %v960 = vpack.c.b16 %v950, %v949
      %v961 = vpack.c.b16 %v952, %v951
      %v962 = vpack.c.b16 %v954, %v953
      %v967 = vunpack.c.l.b16 %v919
      %v968 = vunpack.c.l.b16 %v920
      %v969 = vunpack.c.l.b16 %v921
      %v970 = vunpack.c.l.b16 %v922
      %v971 = vpack.c.b16 %v968, %v967
      %v972 = vpack.c.b16 %v970, %v969
      %v976 = vsel %vm520, %v955, 0
      %v979 = vsel %vm520, %v956, 0
      %v982 = vsel %vm520, %v957, 0
      %v985 = vsel %vm520, %v958, 0
      %v988 = vsel %vm520, %v959, 0
      %v991 = vsel %vm520, %v960, 0
      %v994 = vsel %vm520, %v961, 0
      %v997 = vsel %vm520, %v962, 0
      %999 = vmatpush.bf16.msra.mxu0 0
      %1000 = vmatpush.bf16.msra.mxu0 0
      %1001 = vmatpush.bf16.msra.mxu0 0
      %1002 = vmatpush.bf16.msra.mxu0 0
      %1003 = vmatpush.bf16.msra.mxu0 0
      %1004 = vmatpush.bf16.msra.mxu0 0
      %1005 = vmatpush.bf16.msra.mxu0 %v972
      %1006 = vmatpush.bf16.msra.mxu0 %v971
      %1007 = vmatmul.bf16.gmra.mxu0 %v976
      %v1008 = vpop.f32.mrf.mxu0
      %v1009 = vadd.f32 0.0, %v1008
      %v1010 = vpop.f32.mrf.mxu0
      %v1011 = vadd.f32 0.0, %v1010
      %1012 = vmatmul.bf16.gmra.mxu0 %v979
      %v1013 = vpop.f32.mrf.mxu0
      %v1014 = vadd.f32 0.0, %v1013
      %v1015 = vpop.f32.mrf.mxu0
      %v1016 = vadd.f32 0.0, %v1015
      %1017 = vmatmul.bf16.gmra.mxu0 %v982
      %v1018 = vpop.f32.mrf.mxu0
      %v1019 = vadd.f32 0.0, %v1018
      %v1020 = vpop.f32.mrf.mxu0
      %v1021 = vadd.f32 0.0, %v1020
      %1022 = vmatmul.bf16.gmra.mxu0 %v985
      %v1023 = vpop.f32.mrf.mxu0
      %v1024 = vadd.f32 0.0, %v1023
      %v1025 = vpop.f32.mrf.mxu0
      %v1026 = vadd.f32 0.0, %v1025
      %1027 = vmatmul.bf16.gmra.mxu0 %v988
      %v1028 = vpop.f32.mrf.mxu0
      %v1029 = vadd.f32 0.0, %v1028
      %v1030 = vpop.f32.mrf.mxu0
      %v1031 = vadd.f32 0.0, %v1030
      %1032 = vmatmul.bf16.gmra.mxu0 %v991
      %v1033 = vpop.f32.mrf.mxu0
      %v1034 = vadd.f32 0.0, %v1033
      %v1035 = vpop.f32.mrf.mxu0
      %v1036 = vadd.f32 0.0, %v1035
      %1037 = vmatmul.bf16.gmra.mxu0 %v994
      %v1038 = vpop.f32.mrf.mxu0
      %v1039 = vadd.f32 0.0, %v1038
      %v1040 = vpop.f32.mrf.mxu0
      %v1041 = vadd.f32 0.0, %v1040
      %1042 = vmatmul.bf16.gmra.mxu0 %v997
      %v1043 = vpop.f32.mrf.mxu0
      %v1044 = vadd.f32 0.0, %v1043
      %v1045 = vpop.f32.mrf.mxu0
      %v1046 = vadd.f32 0.0, %v1045
      %1047 = vdwg.mxu0
      %v1048 = vmul.f32 %v1009, %v597
      %v1049 = vmul.f32 %v1011, %v602
      %v1050 = vmul.f32 %v1014, %v607
      %v1051 = vmul.f32 %v1016, %v612
      %v1052 = vmul.f32 %v1019, %v617
      %v1053 = vmul.f32 %v1021, %v622
      %v1054 = vmul.f32 %v1024, %v627
      %v1055 = vmul.f32 %v1026, %v632
      %v1056 = vmul.f32 %v1029, %v637
      %v1057 = vmul.f32 %v1031, %v642
      %v1058 = vmul.f32 %v1034, %v647
      %v1059 = vmul.f32 %v1036, %v652
      %v1060 = vmul.f32 %v1039, %v657
      %v1061 = vmul.f32 %v1041, %v662
      %v1062 = vmul.f32 %v1044, %v667
      %v1063 = vmul.f32 %v1046, %v672
      %v1064 = vpack.c.bf16 %v1048, %v1048
      %v1065 = vpack.c.bf16 %v1049, %v1049
      %v1066 = vpack.c.bf16 %v1050, %v1050
      %v1067 = vpack.c.bf16 %v1051, %v1051
      %v1068 = vpack.c.bf16 %v1052, %v1052
      %v1069 = vpack.c.bf16 %v1053, %v1053
      %v1070 = vpack.c.bf16 %v1054, %v1054
      %v1071 = vpack.c.bf16 %v1055, %v1055
      %v1072 = vpack.c.bf16 %v1056, %v1056
      %v1073 = vpack.c.bf16 %v1057, %v1057
      %v1074 = vpack.c.bf16 %v1058, %v1058
      %v1075 = vpack.c.bf16 %v1059, %v1059
      %v1076 = vpack.c.bf16 %v1060, %v1060
      %v1077 = vpack.c.bf16 %v1061, %v1061
      %v1078 = vpack.c.bf16 %v1062, %v1062
      %v1079 = vpack.c.bf16 %v1063, %v1063
      %v1096 = vunpack.c.l.b16 %v1064
      %v1097 = vunpack.c.l.b16 %v1065
      %v1098 = vunpack.c.l.b16 %v1066
      %v1099 = vunpack.c.l.b16 %v1067
      %v1100 = vunpack.c.l.b16 %v1068
      %v1101 = vunpack.c.l.b16 %v1069
      %v1102 = vunpack.c.l.b16 %v1070
      %v1103 = vunpack.c.l.b16 %v1071
      %v1104 = vunpack.c.l.b16 %v1072
      %v1105 = vunpack.c.l.b16 %v1073
      %v1106 = vunpack.c.l.b16 %v1074
      %v1107 = vunpack.c.l.b16 %v1075
      %v1108 = vunpack.c.l.b16 %v1076
      %v1109 = vunpack.c.l.b16 %v1077
      %v1110 = vunpack.c.l.b16 %v1078
      %v1111 = vunpack.c.l.b16 %v1079
      %v1112 = vpack.c.b16 %v1097, %v1096
      %v1113 = vpack.c.b16 %v1099, %v1098
      %v1114 = vpack.c.b16 %v1101, %v1100
      %v1115 = vpack.c.b16 %v1103, %v1102
      %v1116 = vpack.c.b16 %v1105, %v1104
      %v1117 = vpack.c.b16 %v1107, %v1106
      %v1118 = vpack.c.b16 %v1109, %v1108
      %v1119 = vpack.c.b16 %v1111, %v1110
      %1128 = vmatpush.bf16.msra.mxu0 %v1119
      %1129 = vmatpush.bf16.msra.mxu0 %v1118
      %1130 = vmatpush.bf16.msra.mxu0 %v1117
      %1131 = vmatpush.bf16.msra.mxu0 %v1116
      %1132 = vmatpush.bf16.msra.mxu0 %v1115
      %1133 = vmatpush.bf16.msra.mxu0 %v1114
      %1134 = vmatpush.bf16.msra.mxu0 %v1113
      %1135 = vmatpush.bf16.msra.mxu0 %v1112
      %1136 = vmatmul.bf16.gmra.mxu0 %v738
      %v1137 = vpop.f32.mrf.mxu0
      %v1138 = vadd.f32 0.0, %v1137
      %v1139 = vpop.f32.mrf.mxu0
      %v1140 = vadd.f32 0.0, %v1139
      %1141 = vmatmul.bf16.gmra.mxu0 %v739
      %v1142 = vpop.f32.mrf.mxu0
      %v1143 = vadd.f32 0.0, %v1142
      %v1144 = vpop.f32.mrf.mxu0
      %v1145 = vadd.f32 0.0, %v1144
      %1146 = vmatmul.bf16.gmra.mxu0 %v740
      %v1147 = vpop.f32.mrf.mxu0
      %v1148 = vadd.f32 0.0, %v1147
      %v1149 = vpop.f32.mrf.mxu0
      %v1150 = vadd.f32 0.0, %v1149
      %1151 = vmatmul.bf16.gmra.mxu0 %v741
      %v1152 = vpop.f32.mrf.mxu0
      %v1153 = vadd.f32 0.0, %v1152
      %v1154 = vpop.f32.mrf.mxu0
      %v1155 = vadd.f32 0.0, %v1154
      %1156 = vmatmul.bf16.gmra.mxu0 %v742
      %v1157 = vpop.f32.mrf.mxu0
      %v1158 = vadd.f32 0.0, %v1157
      %v1159 = vpop.f32.mrf.mxu0
      %v1160 = vadd.f32 0.0, %v1159
      %1161 = vmatmul.bf16.gmra.mxu0 %v743
      %v1162 = vpop.f32.mrf.mxu0
      %v1163 = vadd.f32 0.0, %v1162
      %v1164 = vpop.f32.mrf.mxu0
      %v1165 = vadd.f32 0.0, %v1164
      %1166 = vmatmul.bf16.gmra.mxu0 %v744
      %v1167 = vpop.f32.mrf.mxu0
      %v1168 = vadd.f32 0.0, %v1167
      %v1169 = vpop.f32.mrf.mxu0
      %v1170 = vadd.f32 0.0, %v1169
      %1171 = vmatmul.bf16.gmra.mxu0 %v745
      %v1172 = vpop.f32.mrf.mxu0
      %v1173 = vadd.f32 0.0, %v1172
      %v1174 = vpop.f32.mrf.mxu0
      %v1175 = vadd.f32 0.0, %v1174
      %1176 = vdwg.mxu0
      %v1177 = vmul.f32 %v1138, %v597
      %v1178 = vmul.f32 %v1140, %v602
      %v1179 = vmul.f32 %v1143, %v607
      %v1180 = vmul.f32 %v1145, %v612
      %v1181 = vmul.f32 %v1148, %v617
      %v1182 = vmul.f32 %v1150, %v622
      %v1183 = vmul.f32 %v1153, %v627
      %v1184 = vmul.f32 %v1155, %v632
      %v1185 = vmul.f32 %v1158, %v637
      %v1186 = vmul.f32 %v1160, %v642
      %v1187 = vmul.f32 %v1163, %v647
      %v1188 = vmul.f32 %v1165, %v652
      %v1189 = vmul.f32 %v1168, %v657
      %v1190 = vmul.f32 %v1170, %v662
      %v1191 = vmul.f32 %v1173, %v667
      %v1192 = vmul.f32 %v1175, %v672
      %v1193 = vld [vmem:[%s8] sm:$0x1]
      %v1195 = vperm.slane %v1193, 0
      %v1197 = vadd.f32 %v1177, %v1195
      %v1198 = vadd.f32 %v1178, %v1195
      %v1199 = vadd.f32 %v1179, %v1195
      %v1200 = vadd.f32 %v1180, %v1195
      %v1201 = vadd.f32 %v1181, %v1195
      %v1202 = vadd.f32 %v1182, %v1195
      %v1203 = vadd.f32 %v1183, %v1195
      %v1204 = vadd.f32 %v1184, %v1195
      %v1205 = vadd.f32 %v1185, %v1195
      %v1206 = vadd.f32 %v1186, %v1195
      %v1207 = vadd.f32 %v1187, %v1195
      %v1208 = vadd.f32 %v1188, %v1195
      %v1209 = vadd.f32 %v1189, %v1195
      %v1210 = vadd.f32 %v1190, %v1195
      %v1211 = vadd.f32 %v1191, %v1195
      %v1212 = vadd.f32 %v1192, %v1195
      %v1213 = vmax.f32 %v1197, 0.0
      %v1214 = vmax.f32 %v1198, 0.0
      %v1215 = vmax.f32 %v1199, 0.0
      %v1216 = vmax.f32 %v1200, 0.0
      %v1217 = vmax.f32 %v1201, 0.0
      %v1218 = vmax.f32 %v1202, 0.0
      %v1219 = vmax.f32 %v1203, 0.0
      %v1220 = vmax.f32 %v1204, 0.0
      %v1221 = vmax.f32 %v1205, 0.0
      %v1222 = vmax.f32 %v1206, 0.0
      %v1223 = vmax.f32 %v1207, 0.0
      %v1224 = vmax.f32 %v1208, 0.0
      %v1225 = vmax.f32 %v1209, 0.0
      %v1226 = vmax.f32 %v1210, 0.0
      %v1227 = vmax.f32 %v1211, 0.0
      %v1228 = vmax.f32 %v1212, 0.0
      %v1229 = vpack.c.bf16 %v1213, %v1213
      %v1230 = vpack.c.bf16 %v1214, %v1214
      %v1231 = vpack.c.bf16 %v1215, %v1215
      %v1232 = vpack.c.bf16 %v1216, %v1216
      %v1233 = vpack.c.bf16 %v1217, %v1217
      %v1234 = vpack.c.bf16 %v1218, %v1218
      %v1235 = vpack.c.bf16 %v1219, %v1219
      %v1236 = vpack.c.bf16 %v1220, %v1220
      %v1237 = vpack.c.bf16 %v1221, %v1221
      %v1238 = vpack.c.bf16 %v1222, %v1222
      %v1239 = vpack.c.bf16 %v1223, %v1223
      %v1240 = vpack.c.bf16 %v1224, %v1224
      %v1241 = vpack.c.bf16 %v1225, %v1225
      %v1242 = vpack.c.bf16 %v1226, %v1226
      %v1243 = vpack.c.bf16 %v1227, %v1227
      %v1244 = vpack.c.bf16 %v1228, %v1228
      %v1245 = vld [vmem:[%s6] sm:$0xf]
      %v1246 = vld [vmem:[%s6 + $0x4] sm:$0xf]
      %v1247 = vld [vmem:[%s6 + $0x8] sm:$0xf]
      %v1248 = vld [vmem:[%s6 + $0xc] sm:$0xf]
      %v1265 = vunpack.c.l.b16 %v1229
      %v1266 = vunpack.c.l.b16 %v1230
      %v1267 = vunpack.c.l.b16 %v1231
      %v1268 = vunpack.c.l.b16 %v1232
      %v1269 = vunpack.c.l.b16 %v1233
      %v1270 = vunpack.c.l.b16 %v1234
      %v1271 = vunpack.c.l.b16 %v1235
      %v1272 = vunpack.c.l.b16 %v1236
      %v1273 = vunpack.c.l.b16 %v1237
      %v1274 = vunpack.c.l.b16 %v1238
      %v1275 = vunpack.c.l.b16 %v1239
      %v1276 = vunpack.c.l.b16 %v1240
      %v1277 = vunpack.c.l.b16 %v1241
      %v1278 = vunpack.c.l.b16 %v1242
      %v1279 = vunpack.c.l.b16 %v1243
      %v1280 = vunpack.c.l.b16 %v1244
      %v1281 = vpack.c.b16 %v1266, %v1265
      %v1282 = vpack.c.b16 %v1268, %v1267
      %v1283 = vpack.c.b16 %v1270, %v1269
      %v1284 = vpack.c.b16 %v1272, %v1271
      %v1285 = vpack.c.b16 %v1274, %v1273
      %v1286 = vpack.c.b16 %v1276, %v1275
      %v1287 = vpack.c.b16 %v1278, %v1277
      %v1288 = vpack.c.b16 %v1280, %v1279
      %v1293 = vunpack.c.l.b16 %v1245
      %v1294 = vunpack.c.l.b16 %v1246
      %v1295 = vunpack.c.l.b16 %v1247
      %v1296 = vunpack.c.l.b16 %v1248
      %v1297 = vpack.c.b16 %v1294, %v1293
      %v1298 = vpack.c.b16 %v1296, %v1295
      %v1302 = vsel %vm520, %v1281, 0
      %v1305 = vsel %vm520, %v1282, 0
      %v1308 = vsel %vm520, %v1283, 0
      %v1311 = vsel %vm520, %v1284, 0
      %v1314 = vsel %vm520, %v1285, 0
      %v1317 = vsel %vm520, %v1286, 0
      %v1320 = vsel %vm520, %v1287, 0
      %v1323 = vsel %vm520, %v1288, 0
      %1325 = vmatpush.bf16.msra.mxu0 0
      %1326 = vmatpush.bf16.msra.mxu0 0
      %1327 = vmatpush.bf16.msra.mxu0 0
      %1328 = vmatpush.bf16.msra.mxu0 0
      %1329 = vmatpush.bf16.msra.mxu0 0
      %1330 = vmatpush.bf16.msra.mxu0 0
      %1331 = vmatpush.bf16.msra.mxu0 %v1298
      %1332 = vmatpush.bf16.msra.mxu0 %v1297
      %1333 = vmatmul.bf16.gmra.mxu0 %v1302
      %v1334 = vpop.f32.mrf.mxu0
      %v1335 = vadd.f32 0.0, %v1334
      %v1336 = vpop.f32.mrf.mxu0
      %v1337 = vadd.f32 0.0, %v1336
      %1338 = vmatmul.bf16.gmra.mxu0 %v1305
      %v1339 = vpop.f32.mrf.mxu0
      %v1340 = vadd.f32 0.0, %v1339
      %v1341 = vpop.f32.mrf.mxu0
      %v1342 = vadd.f32 0.0, %v1341
      %1343 = vmatmul.bf16.gmra.mxu0 %v1308
      %v1344 = vpop.f32.mrf.mxu0
      %v1345 = vadd.f32 0.0, %v1344
      %v1346 = vpop.f32.mrf.mxu0
      %v1347 = vadd.f32 0.0, %v1346
      %1348 = vmatmul.bf16.gmra.mxu0 %v1311
      %v1349 = vpop.f32.mrf.mxu0
      %v1350 = vadd.f32 0.0, %v1349
      %v1351 = vpop.f32.mrf.mxu0
      %v1352 = vadd.f32 0.0, %v1351
      %1353 = vmatmul.bf16.gmra.mxu0 %v1314
      %v1354 = vpop.f32.mrf.mxu0
      %v1355 = vadd.f32 0.0, %v1354
      %v1356 = vpop.f32.mrf.mxu0
      %v1357 = vadd.f32 0.0, %v1356
      %1358 = vmatmul.bf16.gmra.mxu0 %v1317
      %v1359 = vpop.f32.mrf.mxu0
      %v1360 = vadd.f32 0.0, %v1359
      %v1361 = vpop.f32.mrf.mxu0
      %v1362 = vadd.f32 0.0, %v1361
      %1363 = vmatmul.bf16.gmra.mxu0 %v1320
      %v1364 = vpop.f32.mrf.mxu0
      %v1365 = vadd.f32 0.0, %v1364
      %v1366 = vpop.f32.mrf.mxu0
      %v1367 = vadd.f32 0.0, %v1366
      %1368 = vmatmul.bf16.gmra.mxu0 %v1323
      %v1369 = vpop.f32.mrf.mxu0
      %v1370 = vadd.f32 0.0, %v1369
      %v1371 = vpop.f32.mrf.mxu0
      %v1372 = vadd.f32 0.0, %v1371
      %1373 = vdwg.mxu0
      %v1374 = vmul.f32 %v1335, %v597
      %v1375 = vmul.f32 %v1337, %v602
      %v1376 = vmul.f32 %v1340, %v607
      %v1377 = vmul.f32 %v1342, %v612
      %v1378 = vmul.f32 %v1345, %v617
      %v1379 = vmul.f32 %v1347, %v622
      %v1380 = vmul.f32 %v1350, %v627
      %v1381 = vmul.f32 %v1352, %v632
      %v1382 = vmul.f32 %v1355, %v637
      %v1383 = vmul.f32 %v1357, %v642
      %v1384 = vmul.f32 %v1360, %v647
      %v1385 = vmul.f32 %v1362, %v652
      %v1386 = vmul.f32 %v1365, %v657
      %v1387 = vmul.f32 %v1367, %v662
      %v1388 = vmul.f32 %v1370, %v667
      %v1389 = vmul.f32 %v1372, %v672
      %v1390 = vpack.c.bf16 %v1374, %v1374
      %v1391 = vpack.c.bf16 %v1375, %v1375
      %v1392 = vpack.c.bf16 %v1376, %v1376
      %v1393 = vpack.c.bf16 %v1377, %v1377
      %v1394 = vpack.c.bf16 %v1378, %v1378
      %v1395 = vpack.c.bf16 %v1379, %v1379
      %v1396 = vpack.c.bf16 %v1380, %v1380
      %v1397 = vpack.c.bf16 %v1381, %v1381
      %v1398 = vpack.c.bf16 %v1382, %v1382
      %v1399 = vpack.c.bf16 %v1383, %v1383
      %v1400 = vpack.c.bf16 %v1384, %v1384
      %v1401 = vpack.c.bf16 %v1385, %v1385
      %v1402 = vpack.c.bf16 %v1386, %v1386
      %v1403 = vpack.c.bf16 %v1387, %v1387
      %v1404 = vpack.c.bf16 %v1388, %v1388
      %v1405 = vpack.c.bf16 %v1389, %v1389
      %v1422 = vunpack.c.l.b16 %v1390
      %v1423 = vunpack.c.l.b16 %v1391
      %v1424 = vunpack.c.l.b16 %v1392
      %v1425 = vunpack.c.l.b16 %v1393
      %v1426 = vunpack.c.l.b16 %v1394
      %v1427 = vunpack.c.l.b16 %v1395
      %v1428 = vunpack.c.l.b16 %v1396
      %v1429 = vunpack.c.l.b16 %v1397
      %v1430 = vunpack.c.l.b16 %v1398
      %v1431 = vunpack.c.l.b16 %v1399
      %v1432 = vunpack.c.l.b16 %v1400
      %v1433 = vunpack.c.l.b16 %v1401
      %v1434 = vunpack.c.l.b16 %v1402
      %v1435 = vunpack.c.l.b16 %v1403
      %v1436 = vunpack.c.l.b16 %v1404
      %v1437 = vunpack.c.l.b16 %v1405
      %v1438 = vpack.c.b16 %v1423, %v1422
      %v1439 = vpack.c.b16 %v1425, %v1424
      %v1440 = vpack.c.b16 %v1427, %v1426
      %v1441 = vpack.c.b16 %v1429, %v1428
      %v1442 = vpack.c.b16 %v1431, %v1430
      %v1443 = vpack.c.b16 %v1433, %v1432
      %v1444 = vpack.c.b16 %v1435, %v1434
      %v1445 = vpack.c.b16 %v1437, %v1436
      %1454 = vmatpush.bf16.msra.mxu0 %v1445
      %1455 = vmatpush.bf16.msra.mxu0 %v1444
      %1456 = vmatpush.bf16.msra.mxu0 %v1443
      %1457 = vmatpush.bf16.msra.mxu0 %v1442
      %1458 = vmatpush.bf16.msra.mxu0 %v1441
      %1459 = vmatpush.bf16.msra.mxu0 %v1440
      %1460 = vmatpush.bf16.msra.mxu0 %v1439
      %1461 = vmatpush.bf16.msra.mxu0 %v1438
      %1462 = vmatmul.bf16.gmra.mxu0 %v738
      %v1463 = vpop.f32.mrf.mxu0
      %v1464 = vadd.f32 0.0, %v1463
      %v1465 = vpop.f32.mrf.mxu0
      %v1466 = vadd.f32 0.0, %v1465
      %1467 = vmatmul.bf16.gmra.mxu0 %v739
      %v1468 = vpop.f32.mrf.mxu0
      %v1469 = vadd.f32 0.0, %v1468
      %v1470 = vpop.f32.mrf.mxu0
      %v1471 = vadd.f32 0.0, %v1470
      %1472 = vmatmul.bf16.gmra.mxu0 %v740
      %v1473 = vpop.f32.mrf.mxu0
      %v1474 = vadd.f32 0.0, %v1473
      %v1475 = vpop.f32.mrf.mxu0
      %v1476 = vadd.f32 0.0, %v1475
      %1477 = vmatmul.bf16.gmra.mxu0 %v741
      %v1478 = vpop.f32.mrf.mxu0
      %v1479 = vadd.f32 0.0, %v1478
      %v1480 = vpop.f32.mrf.mxu0
      %v1481 = vadd.f32 0.0, %v1480
      %1482 = vmatmul.bf16.gmra.mxu0 %v742
      %v1483 = vpop.f32.mrf.mxu0
      %v1484 = vadd.f32 0.0, %v1483
      %v1485 = vpop.f32.mrf.mxu0
      %v1486 = vadd.f32 0.0, %v1485
      %1487 = vmatmul.bf16.gmra.mxu0 %v743
      %v1488 = vpop.f32.mrf.mxu0
      %v1489 = vadd.f32 0.0, %v1488
      %v1490 = vpop.f32.mrf.mxu0
      %v1491 = vadd.f32 0.0, %v1490
      %1492 = vmatmul.bf16.gmra.mxu0 %v744
      %v1493 = vpop.f32.mrf.mxu0
      %v1494 = vadd.f32 0.0, %v1493
      %v1495 = vpop.f32.mrf.mxu0
      %v1496 = vadd.f32 0.0, %v1495
      %1497 = vmatmul.bf16.gmra.mxu0 %v745
      %v1498 = vpop.f32.mrf.mxu0
      %v1499 = vadd.f32 0.0, %v1498
      %v1500 = vpop.f32.mrf.mxu0
      %v1501 = vadd.f32 0.0, %v1500
      %1502 = vdwg.mxu0
      %v1503 = vmul.f32 %v1464, %v597
      %v1504 = vmul.f32 %v1466, %v602
      %v1505 = vmul.f32 %v1469, %v607
      %v1506 = vmul.f32 %v1471, %v612
      %v1507 = vmul.f32 %v1474, %v617
      %v1508 = vmul.f32 %v1476, %v622
      %v1509 = vmul.f32 %v1479, %v627
      %v1510 = vmul.f32 %v1481, %v632
      %v1511 = vmul.f32 %v1484, %v637
      %v1512 = vmul.f32 %v1486, %v642
      %v1513 = vmul.f32 %v1489, %v647
      %v1514 = vmul.f32 %v1491, %v652
      %v1515 = vmul.f32 %v1494, %v657
      %v1516 = vmul.f32 %v1496, %v662
      %v1517 = vmul.f32 %v1499, %v667
      %v1518 = vmul.f32 %v1501, %v672
      %v1519 = vld [vmem:[%s9] sm:$0x1]
      %v1521 = vperm.slane %v1519, 0
      %v1523 = vadd.f32 %v1503, %v1521
      %v1524 = vadd.f32 %v1504, %v1521
      %v1525 = vadd.f32 %v1505, %v1521
      %v1526 = vadd.f32 %v1506, %v1521
      %v1527 = vadd.f32 %v1507, %v1521
      %v1528 = vadd.f32 %v1508, %v1521
      %v1529 = vadd.f32 %v1509, %v1521
      %v1530 = vadd.f32 %v1510, %v1521
      %v1531 = vadd.f32 %v1511, %v1521
      %v1532 = vadd.f32 %v1512, %v1521
      %v1533 = vadd.f32 %v1513, %v1521
      %v1534 = vadd.f32 %v1514, %v1521
      %v1535 = vadd.f32 %v1515, %v1521
      %v1536 = vadd.f32 %v1516, %v1521
      %v1537 = vadd.f32 %v1517, %v1521
      %v1538 = vadd.f32 %v1518, %v1521
      %v1539 = vld [vmem:[%s410] sm:$0xff]
      %1540 = vmatpush.msra.mxu0 %v1538
      %1541 = vmatpush.msra.mxu0 %v1537
      %1542 = vmatpush.msra.mxu0 %v1536
      %1543 = vmatpush.msra.mxu0 %v1535
      %1544 = vmatpush.msra.mxu0 %v1534
      %1545 = vmatpush.msra.mxu0 %v1533
      %1546 = vmatpush.msra.mxu0 %v1532
      %1547 = vmatpush.msra.mxu0 %v1531
      %1548 = vmatpush.msra.mxu0 %v1530
      %1549 = vmatpush.msra.mxu0 %v1529
      %1550 = vmatpush.msra.mxu0 %v1528
      %1551 = vmatpush.msra.mxu0 %v1527
      %1552 = vmatpush.msra.mxu0 %v1526
      %1553 = vmatpush.msra.mxu0 %v1525
      %1554 = vmatpush.msra.mxu0 %v1524
      %1555 = vmatpush.msra.mxu0 %v1523
      %1556 = vmatmul.f32.gmra.mxu0 %v1539
      %v1557 = vpop.f32.mrf.mxu0
      %v1558 = vadd.f32 0.0, %v1557
      %1559 = vdwg.mxu0
      %1560 = vst.msk [vmem:[%s414] sm:$0xff] %vm520, %v1558
      %p1561 = scmp.lt.s32.totalorder %s21, 1
      %s1562 = scalar_select %p1561, %s21, 1
      %s1563 = smul.addr %s1562, 8
      %s1564 = scalar_lea.vmem %s10, %s1563
      // Predicated region
      $region61: #{gcn_forward.1} parent=59 // pred_check
        %p1565 = pneg %p269
      $region62: #{gcn_forward.1} parent=59 // pred_check_branch
        %1567 = sbr.rel (%p1565) target = $region64
      $region63: #{gcn_forward.1} parent=59 // pred_region
        _
      $region64: #{gcn_forward.1} parent=59 // pred_fallthru
        _
    $region60: #{gcn_forward.1} parent=5 // pred_fallthru
      _
    %p1568 = scmp.le.s32.totalorder 2, %s16
    // Predicated region
    $region65: #{gcn_forward.1} parent=5 // pred_check
      %p1569 = pneg %p1568
    $region66: #{gcn_forward.1} parent=5 // pred_check_branch
      %1571 = sbr.rel (%p1569) target = $region68
    $region67: #{gcn_forward.1} parent=5 // pred_region
      %s1572 = ssub.s32 %s16, 2
      // Predicated region
      $region69: #{gcn_forward.1} parent=67 // pred_check
        %p1573 = pneg %p275
      $region70: #{gcn_forward.1} parent=67 // pred_check_branch
        %1575 = sbr.rel (%p1573) target = $region72
      $region71: #{gcn_forward.1} parent=67 // pred_region
        %p1576 = scmp.lt.s32.totalorder %s22, 1
        %s1577 = scalar_select %p1576, %s22, 1
        %s1578 = smul.addr %s1577, 8
        %s1579 = scalar_lea.vmem %s10, %s1578
      $region72: #{gcn_forward.1} parent=67 // pred_fallthru
        _
    $region68: #{gcn_forward.1} parent=5 // pred_fallthru
      _
  $region6: #{gcn_forward.1} parent=0 // loop_footer
    %s20 = sadd.s32 1, %s16
  $region7: #{gcn_forward.1} parent=0 // loop_footer_branch
    %15 = sbr.rel target = $region3
  $region8: #{gcn_forward.1} parent=0 // loop_exit
    _

</llo_original>
